<compile_context>
chip_gen: v7x
topology: tpu7x:2x2x1
jax: 0.10.0
libtpu: 0.0.40
codegen_flags: <defaults>
</compile_context>

<pallas_src>
import jax
import jax.numpy as jnp
from jax.experimental import pallas as pl
from jax.experimental.pallas import tpu as pltpu

K_IN = 784                     # 28*28, same as torch x.view(B, -1)
NUM_CLASSES = 10
TILE_B_CAP = 2048              # per-step batch tile cap (VMEM-safe on all gens)
VMEM_LIMIT_BYTES = 40 * 1024 * 1024


def classifier_kernel(x_ref,
                      w1_ref, b1_ref,
                      w2_ref, b2_ref,
                      w3_ref, b3_ref,
                      w4_ref, b4_ref,
                      out_ref):
    # Cast x to the weight (bf16) dtype *inside* the kernel: the HBM stream
    # stays whatever the producer handed over (f32 here) and the MXU sees bf16.
    x = x_ref[...].astype(w1_ref.dtype)
    # fc1 + ReLU (f32 accumulation & elementwise)
    h = jnp.dot(x, w1_ref[...], preferred_element_type=jnp.float32)
    h = jnp.maximum(h + b1_ref[...], 0.0)
    # fc2 + ReLU
    h = jnp.dot(h.astype(w2_ref.dtype), w2_ref[...],
                preferred_element_type=jnp.float32)
    h = jnp.maximum(h + b2_ref[...], 0.0)
    # fc3 + ReLU
    h = jnp.dot(h.astype(w3_ref.dtype), w3_ref[...],
                preferred_element_type=jnp.float32)
    h = jnp.maximum(h + b3_ref[...], 0.0)
    # fc4
    logits = jnp.dot(h.astype(w4_ref.dtype), w4_ref[...],
                     preferred_element_type=jnp.float32) + b4_ref[...]
    # log_softmax along dim=1 (classes), max-shifted for stability, all f32
    m = jnp.max(logits, axis=1, keepdims=True)
    shifted = logits - m
    lse = jnp.log(jnp.sum(jnp.exp(shifted), axis=1, keepdims=True))
    out_ref[...] = shifted - lse


def _round_up(x, m):
    return (x + m - 1) // m * m


def _choose_tile_b(B, cap=TILE_B_CAP):
    """Batch tile that (a) satisfies the sublane rule (multiple of 8, or the
    full batch dim), (b) avoids padding x in HBM whenever possible, and
    (c) yields >= 2 grid steps for B >= 16 so v7x can use both TensorCores."""
    if B < 16 or (B % 8 != 0 and B <= cap):
        return B                                # one full-batch block, no pad
    if B % 8 == 0:
        best = 8                                # largest mult-of-8 divisor of B
        for d in range(8, min(cap, B // 2) + 1, 8):
            if B % d == 0:
                best = d
        return best                             # divides B exactly, >= 2 steps
    return min(cap, _round_up(-(-B // 2), 8))   # large non-8-aligned: minimal pad


def classifier_forward(x_nchw, params, *, compute_dtype=jnp.bfloat16):
    """x_nchw: (B, 1, 28, 28) float32 -> (B, 10) f32 log-probabilities."""
    B = x_nchw.shape[0]
    x = x_nchw.reshape(B, -1)                   # (B, 784); dtype passes through

    w1, b1, w2, b2, w3, b3, w4, b4 = params
    # Weights are tiny (~0.5 MB total in bf16): cast once so they sit resident
    # in VMEM at half width. Biases stay f32 (f32 VPU path on all gens).
    w1c, w2c, w3c, w4c = (w.astype(compute_dtype) for w in (w1, w2, w3, w4))

    TILE_B = _choose_tile_b(B)
    B_pad = _round_up(B, TILE_B)
    if B_pad != B:                              # rare: large non-8-aligned batch
        x = jnp.pad(x, ((0, B_pad - B), (0, 0)))
    grid = (B_pad // TILE_B,)

    flops = 2 * B_pad * (K_IN * 256 + 256 * 128 + 128 * 64 + 64 * NUM_CLASSES)
    weight_bytes = sum(int(a.size) * a.dtype.itemsize
                       for a in (w1c, b1, w2c, b2, w3c, b3, w4c, b4))
    bytes_accessed = (int(x.size) * x.dtype.itemsize + weight_bytes
                      + B_pad * NUM_CLASSES * 4)
    cost = pl.CostEstimate(flops=flops,
                           transcendentals=(NUM_CLASSES + 1) * B_pad,  # exp/class + log/row
                           bytes_accessed=int(bytes_accessed))

    x_spec = pl.BlockSpec((TILE_B, K_IN), lambda i: (i, 0))
    out_spec = pl.BlockSpec((TILE_B, NUM_CLASSES), lambda i: (i, 0))

    def call(single_buffer_weights):
        def resident(shape):
            # Same block for every grid step -> weights/biases stay in VMEM.
            # Their block index never changes, so one buffer is enough.
            if single_buffer_weights:
                return pl.BlockSpec(shape, lambda i: (0, 0),
                                    pipeline_mode=pl.Buffered(1))
            return pl.BlockSpec(shape, lambda i: (0, 0))

        return pl.pallas_call(
            classifier_kernel,
            out_shape=jax.ShapeDtypeStruct((B_pad, NUM_CLASSES), jnp.float32),
            grid=grid,
            in_specs=[
                x_spec,
                resident((K_IN, 256)),       resident((1, 256)),
                resident((256, 128)),        resident((1, 128)),
                resident((128, 64)),         resident((1, 64)),
                resident((64, NUM_CLASSES)), resident((1, NUM_CLASSES)),
            ],
            out_specs=out_spec,
            compiler_params=pltpu.CompilerParams(
                dimension_semantics=("parallel",),
                vmem_limit_bytes=VMEM_LIMIT_BYTES),
            cost_estimate=cost,
        )(x, w1c, b1, w2c, b2, w3c, b3, w4c, b4)

    try:
        out = call(single_buffer_weights=True)
    except Exception:
        # pl.Buffered(1) (single-buffered resident weights) not supported by the
        # running JAX -> fall back to default double buffering; only ~0.6 MB of
        # VMEM differs, semantics are identical.
        out = call(single_buffer_weights=False)
    return out[:B]


def init_params(key):
    """torch.nn.Linear-style init (U[-1/sqrt(fan_in), 1/sqrt(fan_in)]).
    Weights stored as (in_features, out_features): x @ W + b == torch x @ W.T + b."""
    dims = [(784, 256), (256, 128), (128, 64), (64, 10)]
    params = []
    keys = jax.random.split(key, 2 * len(dims))
    for i, (fan_in, fan_out) in enumerate(dims):
        bound = 1.0 / (fan_in ** 0.5)
        w = jax.random.uniform(keys[2 * i], (fan_in, fan_out),
                               minval=-bound, maxval=bound, dtype=jnp.float32)
        b = jax.random.uniform(keys[2 * i + 1], (1, fan_out),
                               minval=-bound, maxval=bound, dtype=jnp.float32)
        params += [w, b]
    return tuple(params)


def _reference_forward(x_nchw, params):
    """Pure-JAX f32 reference of the PyTorch module."""
    w1, b1, w2, b2, w3, b3, w4, b4 = params
    x = x_nchw.reshape(x_nchw.shape[0], -1)
    h = jnp.maximum(x @ w1 + b1, 0.0)
    h = jnp.maximum(h @ w2 + b2, 0.0)
    h = jnp.maximum(h @ w3 + b3, 0.0)
    logits = h @ w4 + b4
    return jax.nn.log_softmax(logits, axis=1)


if __name__ == "__main__":
    key = jax.random.PRNGKey(0)
    k_x, k_p = jax.random.split(key)
    params = init_params(k_p)

    ok = True
    # B=8 exercises the single full-batch-block path; B=32 exercises the
    # multi-step grid (TILE_B=16, grid=(2,)) with VMEM-resident weights.
    for B in (8, 32):
        x = jax.random.normal(jax.random.fold_in(k_x, B), (B, 1, 28, 28),
                              dtype=jnp.float32)
        out = jax.block_until_ready(classifier_forward(x, params))
        ref = _reference_forward(x, params)
        probs_sum = jnp.sum(jnp.exp(out), axis=1)
        ok &= out.shape == (B, 10)
        ok &= bool(jnp.all(jnp.abs(probs_sum - 1.0) < 1e-3))
        # loose tolerance because matmul operands are bf16
        ok &= bool(jnp.allclose(out, ref, atol=5e-2, rtol=5e-2))
    assert ok
    print("KERNEL_OK")
</pallas_src>

<mosaic_0001>
module attributes {stable_mosaic.version = 11 : i64} {
  func.func @classifier_kernel(%arg0: i32, %arg1: memref<8x784xf32, #tpu.memory_space<vmem>>, %arg2: memref<784x256xbf16, #tpu.memory_space<vmem>>, %arg3: memref<1x256xf32, #tpu.memory_space<vmem>>, %arg4: memref<256x128xbf16, #tpu.memory_space<vmem>>, %arg5: memref<1x128xf32, #tpu.memory_space<vmem>>, %arg6: memref<128x64xbf16, #tpu.memory_space<vmem>>, %arg7: memref<1x64xf32, #tpu.memory_space<vmem>>, %arg8: memref<64x10xbf16, #tpu.memory_space<vmem>>, %arg9: memref<1x10xf32, #tpu.memory_space<vmem>>, %arg10: memref<8x10xf32, #tpu.memory_space<vmem>>) attributes {dimension_semantics = [#tpu.dimension_semantics<parallel>], iteration_bounds = array<i64: 1>, scalar_prefetch = 0 : i64, scratch_operands = 0 : i64, tpu.core_type = #tpu.core_type<tc>, window_params = [{transform_indices = @transform_0, window_bounds = array<i64: 8, 784>}, {pipeline_mode = #tpu.pipeline_mode<synchronous>, transform_indices = @transform_1, window_bounds = array<i64: 784, 256>}, {pipeline_mode = #tpu.pipeline_mode<synchronous>, transform_indices = @transform_2, window_bounds = array<i64: 1, 256>}, {pipeline_mode = #tpu.pipeline_mode<synchronous>, transform_indices = @transform_3, window_bounds = array<i64: 256, 128>}, {pipeline_mode = #tpu.pipeline_mode<synchronous>, transform_indices = @transform_4, window_bounds = array<i64: 1, 128>}, {pipeline_mode = #tpu.pipeline_mode<synchronous>, transform_indices = @transform_5, window_bounds = array<i64: 128, 64>}, {pipeline_mode = #tpu.pipeline_mode<synchronous>, transform_indices = @transform_6, window_bounds = array<i64: 1, 64>}, {pipeline_mode = #tpu.pipeline_mode<synchronous>, transform_indices = @transform_7, window_bounds = array<i64: 64, 10>}, {pipeline_mode = #tpu.pipeline_mode<synchronous>, transform_indices = @transform_8, window_bounds = array<i64: 1, 10>}, {transform_indices = @transform_9, window_bounds = array<i64: 8, 10>}]} {
    %c0 = arith.constant 0 : index
    %c0_0 = arith.constant 0 : index
    %0 = vector.load %arg1[%c0, %c0_0] : memref<8x784xf32, #tpu.memory_space<vmem>>, vector<8x784xf32>
    %1 = arith.truncf %0 : vector<8x784xf32> to vector<8x784xbf16>
    %c0_1 = arith.constant 0 : index
    %c0_2 = arith.constant 0 : index
    %2 = vector.load %arg2[%c0_1, %c0_2] : memref<784x256xbf16, #tpu.memory_space<vmem>>, vector<784x256xbf16>
    %cst = arith.constant dense<0.000000e+00> : vector<8x256xf32>
    %3 = tpu.matmul %1, %2, %cst {dimension_numbers = #tpu.dot_dimension_numbers<[1], [0], [0], [1], [0, 0, 1, 1], [], []>} : vector<8x784xbf16>, vector<784x256xbf16>, vector<8x256xf32> -> vector<8x256xf32>
    %c0_3 = arith.constant 0 : index
    %c0_4 = arith.constant 0 : index
    %4 = vector.load %arg3[%c0_3, %c0_4] : memref<1x256xf32, #tpu.memory_space<vmem>>, vector<1x256xf32>
    %5 = vector.broadcast %4 : vector<1x256xf32> to vector<8x256xf32>
    %6 = arith.addf %3, %5 : vector<8x256xf32>
    %cst_5 = arith.constant 0.000000e+00 : f32
    %7 = vector.broadcast %cst_5 : f32 to vector<8x256xf32>
    %8 = arith.maximumf %6, %7 : vector<8x256xf32>
    %9 = arith.truncf %8 : vector<8x256xf32> to vector<8x256xbf16>
    %c0_6 = arith.constant 0 : index
    %c0_7 = arith.constant 0 : index
    %10 = vector.load %arg4[%c0_6, %c0_7] : memref<256x128xbf16, #tpu.memory_space<vmem>>, vector<256x128xbf16>
    %cst_8 = arith.constant dense<0.000000e+00> : vector<8x128xf32>
    %11 = tpu.matmul %9, %10, %cst_8 {dimension_numbers = #tpu.dot_dimension_numbers<[1], [0], [0], [1], [0, 0, 1, 1], [], []>} : vector<8x256xbf16>, vector<256x128xbf16>, vector<8x128xf32> -> vector<8x128xf32>
    %c0_9 = arith.constant 0 : index
    %c0_10 = arith.constant 0 : index
    %12 = vector.load %arg5[%c0_9, %c0_10] : memref<1x128xf32, #tpu.memory_space<vmem>>, vector<1x128xf32>
    %13 = vector.broadcast %12 : vector<1x128xf32> to vector<8x128xf32>
    %14 = arith.addf %11, %13 : vector<8x128xf32>
    %cst_11 = arith.constant 0.000000e+00 : f32
    %15 = vector.broadcast %cst_11 : f32 to vector<8x128xf32>
    %16 = arith.maximumf %14, %15 : vector<8x128xf32>
    %17 = arith.truncf %16 : vector<8x128xf32> to vector<8x128xbf16>
    %c0_12 = arith.constant 0 : index
    %c0_13 = arith.constant 0 : index
    %18 = vector.load %arg6[%c0_12, %c0_13] : memref<128x64xbf16, #tpu.memory_space<vmem>>, vector<128x64xbf16>
    %cst_14 = arith.constant dense<0.000000e+00> : vector<8x64xf32>
    %19 = tpu.matmul %17, %18, %cst_14 {dimension_numbers = #tpu.dot_dimension_numbers<[1], [0], [0], [1], [0, 0, 1, 1], [], []>} : vector<8x128xbf16>, vector<128x64xbf16>, vector<8x64xf32> -> vector<8x64xf32>
    %c0_15 = arith.constant 0 : index
    %c0_16 = arith.constant 0 : index
    %20 = vector.load %arg7[%c0_15, %c0_16] : memref<1x64xf32, #tpu.memory_space<vmem>>, vector<1x64xf32>
    %21 = vector.broadcast %20 : vector<1x64xf32> to vector<8x64xf32>
    %22 = arith.addf %19, %21 : vector<8x64xf32>
    %cst_17 = arith.constant 0.000000e+00 : f32
    %23 = vector.broadcast %cst_17 : f32 to vector<8x64xf32>
    %24 = arith.maximumf %22, %23 : vector<8x64xf32>
    %25 = arith.truncf %24 : vector<8x64xf32> to vector<8x64xbf16>
    %c0_18 = arith.constant 0 : index
    %c0_19 = arith.constant 0 : index
    %26 = vector.load %arg8[%c0_18, %c0_19] : memref<64x10xbf16, #tpu.memory_space<vmem>>, vector<64x10xbf16>
    %cst_20 = arith.constant dense<0.000000e+00> : vector<8x10xf32>
    %27 = tpu.matmul %25, %26, %cst_20 {dimension_numbers = #tpu.dot_dimension_numbers<[1], [0], [0], [1], [0, 0, 1, 1], [], []>} : vector<8x64xbf16>, vector<64x10xbf16>, vector<8x10xf32> -> vector<8x10xf32>
    %c0_21 = arith.constant 0 : index
    %c0_22 = arith.constant 0 : index
    %28 = vector.load %arg9[%c0_21, %c0_22] : memref<1x10xf32, #tpu.memory_space<vmem>>, vector<1x10xf32>
    %29 = vector.broadcast %28 : vector<1x10xf32> to vector<8x10xf32>
    %30 = arith.addf %27, %29 : vector<8x10xf32>
    %cst_23 = arith.constant dense<0xFF800000> : vector<8xf32>
    %31 = vector.multi_reduction <maximumf>, %30, %cst_23 [1] : vector<8x10xf32> to vector<8xf32>
    %32 = vector.shape_cast %31 : vector<8xf32> to vector<8x1xf32>
    %33 = vector.broadcast %32 : vector<8x1xf32> to vector<8x10xf32>
    %34 = arith.subf %30, %33 : vector<8x10xf32>
    %35 = math.exp %34 : vector<8x10xf32>
    %cst_24 = arith.constant dense<0.000000e+00> : vector<8xf32>
    %36 = vector.multi_reduction <add>, %35, %cst_24 [1] : vector<8x10xf32> to vector<8xf32>
    %37 = vector.shape_cast %36 : vector<8xf32> to vector<8x1xf32>
    %38 = math.log %37 : vector<8x1xf32>
    %39 = vector.broadcast %38 : vector<8x1xf32> to vector<8x10xf32>
    %40 = arith.subf %34, %39 : vector<8x10xf32>
    %c0_25 = arith.constant 0 : index
    %c0_26 = arith.constant 0 : index
    %41 = vector.load %arg10[%c0_25, %c0_26] : memref<8x10xf32, #tpu.memory_space<vmem>>, vector<8x10xf32>
    tpu.vector_store %arg10[%c0_25, %c0_26], %40 {strides = array<i32>} : memref<8x10xf32, #tpu.memory_space<vmem>>, vector<8x10xf32>,
    return
  }
  func.func @transform_0(%arg0: i32) -> (i32, i32) {
    %c0_i32 = arith.constant 0 : i32
    %c0_i32_0 = arith.constant 0 : i32
    return %arg0, %c0_i32 : i32, i32
  }
  func.func @transform_1(%arg0: i32) -> (i32, i32) {
    %c0_i32 = arith.constant 0 : i32
    %c0_i32_0 = arith.constant 0 : i32
    %c0_i32_1 = arith.constant 0 : i32
    return %c0_i32, %c0_i32_0 : i32, i32
  }
  func.func @transform_2(%arg0: i32) -> (i32, i32) {
    %c0_i32 = arith.constant 0 : i32
    %c0_i32_0 = arith.constant 0 : i32
    %c0_i32_1 = arith.constant 0 : i32
    return %c0_i32, %c0_i32_0 : i32, i32
  }
  func.func @transform_3(%arg0: i32) -> (i32, i32) {
    %c0_i32 = arith.constant 0 : i32
    %c0_i32_0 = arith.constant 0 : i32
    %c0_i32_1 = arith.constant 0 : i32
    return %c0_i32, %c0_i32_0 : i32, i32
  }
  func.func @transform_4(%arg0: i32) -> (i32, i32) {
    %c0_i32 = arith.constant 0 : i32
    %c0_i32_0 = arith.constant 0 : i32
    %c0_i32_1 = arith.constant 0 : i32
    return %c0_i32, %c0_i32_0 : i32, i32
  }
  func.func @transform_5(%arg0: i32) -> (i32, i32) {
    %c0_i32 = arith.constant 0 : i32
    %c0_i32_0 = arith.constant 0 : i32
    %c0_i32_1 = arith.constant 0 : i32
    return %c0_i32, %c0_i32_0 : i32, i32
  }
  func.func @transform_6(%arg0: i32) -> (i32, i32) {
    %c0_i32 = arith.constant 0 : i32
    %c0_i32_0 = arith.constant 0 : i32
    %c0_i32_1 = arith.constant 0 : i32
    return %c0_i32, %c0_i32_0 : i32, i32
  }
  func.func @transform_7(%arg0: i32) -> (i32, i32) {
    %c0_i32 = arith.constant 0 : i32
    %c0_i32_0 = arith.constant 0 : i32
    %c0_i32_1 = arith.constant 0 : i32
    return %c0_i32, %c0_i32_0 : i32, i32
  }
  func.func @transform_8(%arg0: i32) -> (i32, i32) {
    %c0_i32 = arith.constant 0 : i32
    %c0_i32_0 = arith.constant 0 : i32
    %c0_i32_1 = arith.constant 0 : i32
    return %c0_i32, %c0_i32_0 : i32, i32
  }
  func.func @transform_9(%arg0: i32) -> (i32, i32) {
    %c0_i32 = arith.constant 0 : i32
    %c0_i32_0 = arith.constant 0 : i32
    return %arg0, %c0_i32 : i32, i32
  }
}

module attributes {stable_mosaic.version = 11 : i64} {
  func.func @classifier_kernel(%arg0: i32, %arg1: memref<8x784xf32, #tpu.memory_space<vmem>>, %arg2: memref<784x256xbf16, #tpu.memory_space<vmem>>, %arg3: memref<1x256xf32, #tpu.memory_space<vmem>>, %arg4: memref<256x128xbf16, #tpu.memory_space<vmem>>, %arg5: memref<1x128xf32, #tpu.memory_space<vmem>>, %arg6: memref<128x64xbf16, #tpu.memory_space<vmem>>, %arg7: memref<1x64xf32, #tpu.memory_space<vmem>>, %arg8: memref<64x10xbf16, #tpu.memory_space<vmem>>, %arg9: memref<1x10xf32, #tpu.memory_space<vmem>>, %arg10: memref<8x10xf32, #tpu.memory_space<vmem>>) attributes {dimension_semantics = [#tpu.dimension_semantics<parallel>], iteration_bounds = array<i64: 1>, scalar_prefetch = 0 : i64, scratch_operands = 0 : i64, tpu.core_type = #tpu.core_type<tc>, window_params = [{transform_indices = @transform_0, window_bounds = array<i64: 8, 784>}, {pipeline_mode = #tpu.pipeline_mode<synchronous>, transform_indices = @transform_1, window_bounds = array<i64: 784, 256>}, {pipeline_mode = #tpu.pipeline_mode<synchronous>, transform_indices = @transform_2, window_bounds = array<i64: 1, 256>}, {pipeline_mode = #tpu.pipeline_mode<synchronous>, transform_indices = @transform_3, window_bounds = array<i64: 256, 128>}, {pipeline_mode = #tpu.pipeline_mode<synchronous>, transform_indices = @transform_4, window_bounds = array<i64: 1, 128>}, {pipeline_mode = #tpu.pipeline_mode<synchronous>, transform_indices = @transform_5, window_bounds = array<i64: 128, 64>}, {pipeline_mode = #tpu.pipeline_mode<synchronous>, transform_indices = @transform_6, window_bounds = array<i64: 1, 64>}, {pipeline_mode = #tpu.pipeline_mode<synchronous>, transform_indices = @transform_7, window_bounds = array<i64: 64, 10>}, {pipeline_mode = #tpu.pipeline_mode<synchronous>, transform_indices = @transform_8, window_bounds = array<i64: 1, 10>}, {transform_indices = @transform_9, window_bounds = array<i64: 8, 10>}]} {
    %c0 = arith.constant 0 : index
    %c0_0 = arith.constant 0 : index
    %0 = vector.load %arg1[%c0, %c0_0] : memref<8x784xf32, #tpu.memory_space<vmem>>, vector<8x784xf32>
    %1 = arith.truncf %0 : vector<8x784xf32> to vector<8x784xbf16>
    %c0_1 = arith.constant 0 : index
    %c0_2 = arith.constant 0 : index
    %2 = vector.load %arg2[%c0_1, %c0_2] : memref<784x256xbf16, #tpu.memory_space<vmem>>, vector<784x256xbf16>
    %cst = arith.constant dense<0.000000e+00> : vector<8x256xf32>
    %3 = tpu.matmul %1, %2, %cst {dimension_numbers = #tpu.dot_dimension_numbers<[1], [0], [0], [1], [0, 0, 1, 1], [], []>} : vector<8x784xbf16>, vector<784x256xbf16>, vector<8x256xf32> -> vector<8x256xf32>
    %c0_3 = arith.constant 0 : index
    %c0_4 = arith.constant 0 : index
    %4 = vector.load %arg3[%c0_3, %c0_4] : memref<1x256xf32, #tpu.memory_space<vmem>>, vector<1x256xf32>
    %5 = vector.broadcast %4 : vector<1x256xf32> to vector<8x256xf32>
    %6 = arith.addf %3, %5 : vector<8x256xf32>
    %cst_5 = arith.constant 0.000000e+00 : f32
    %7 = vector.broadcast %cst_5 : f32 to vector<8x256xf32>
    %8 = arith.maximumf %6, %7 : vector<8x256xf32>
    %9 = arith.truncf %8 : vector<8x256xf32> to vector<8x256xbf16>
    %c0_6 = arith.constant 0 : index
    %c0_7 = arith.constant 0 : index
    %10 = vector.load %arg4[%c0_6, %c0_7] : memref<256x128xbf16, #tpu.memory_space<vmem>>, vector<256x128xbf16>
    %cst_8 = arith.constant dense<0.000000e+00> : vector<8x128xf32>
    %11 = tpu.matmul %9, %10, %cst_8 {dimension_numbers = #tpu.dot_dimension_numbers<[1], [0], [0], [1], [0, 0, 1, 1], [], []>} : vector<8x256xbf16>, vector<256x128xbf16>, vector<8x128xf32> -> vector<8x128xf32>
    %c0_9 = arith.constant 0 : index
    %c0_10 = arith.constant 0 : index
    %12 = vector.load %arg5[%c0_9, %c0_10] : memref<1x128xf32, #tpu.memory_space<vmem>>, vector<1x128xf32>
    %13 = vector.broadcast %12 : vector<1x128xf32> to vector<8x128xf32>
    %14 = arith.addf %11, %13 : vector<8x128xf32>
    %cst_11 = arith.constant 0.000000e+00 : f32
    %15 = vector.broadcast %cst_11 : f32 to vector<8x128xf32>
    %16 = arith.maximumf %14, %15 : vector<8x128xf32>
    %17 = arith.truncf %16 : vector<8x128xf32> to vector<8x128xbf16>
    %c0_12 = arith.constant 0 : index
    %c0_13 = arith.constant 0 : index
    %18 = vector.load %arg6[%c0_12, %c0_13] : memref<128x64xbf16, #tpu.memory_space<vmem>>, vector<128x64xbf16>
    %cst_14 = arith.constant dense<0.000000e+00> : vector<8x64xf32>
    %19 = tpu.matmul %17, %18, %cst_14 {dimension_numbers = #tpu.dot_dimension_numbers<[1], [0], [0], [1], [0, 0, 1, 1], [], []>} : vector<8x128xbf16>, vector<128x64xbf16>, vector<8x64xf32> -> vector<8x64xf32>
    %c0_15 = arith.constant 0 : index
    %c0_16 = arith.constant 0 : index
    %20 = vector.load %arg7[%c0_15, %c0_16] : memref<1x64xf32, #tpu.memory_space<vmem>>, vector<1x64xf32>
    %21 = vector.broadcast %20 : vector<1x64xf32> to vector<8x64xf32>
    %22 = arith.addf %19, %21 : vector<8x64xf32>
    %cst_17 = arith.constant 0.000000e+00 : f32
    %23 = vector.broadcast %cst_17 : f32 to vector<8x64xf32>
    %24 = arith.maximumf %22, %23 : vector<8x64xf32>
    %25 = arith.truncf %24 : vector<8x64xf32> to vector<8x64xbf16>
    %c0_18 = arith.constant 0 : index
    %c0_19 = arith.constant 0 : index
    %26 = vector.load %arg8[%c0_18, %c0_19] : memref<64x10xbf16, #tpu.memory_space<vmem>>, vector<64x10xbf16>
    %cst_20 = arith.constant dense<0.000000e+00> : vector<8x10xf32>
    %27 = tpu.matmul %25, %26, %cst_20 {dimension_numbers = #tpu.dot_dimension_numbers<[1], [0], [0], [1], [0, 0, 1, 1], [], []>} : vector<8x64xbf16>, vector<64x10xbf16>, vector<8x10xf32> -> vector<8x10xf32>
    %c0_21 = arith.constant 0 : index
    %c0_22 = arith.constant 0 : index
    %28 = vector.load %arg9[%c0_21, %c0_22] : memref<1x10xf32, #tpu.memory_space<vmem>>, vector<1x10xf32>
    %29 = vector.broadcast %28 : vector<1x10xf32> to vector<8x10xf32>
    %30 = arith.addf %27, %29 : vector<8x10xf32>
    %cst_23 = arith.constant dense<0xFF800000> : vector<8xf32>
    %31 = vector.multi_reduction <maximumf>, %30, %cst_23 [1] : vector<8x10xf32> to vector<8xf32>
    %32 = vector.shape_cast %31 : vector<8xf32> to vector<8x1xf32>
    %33 = vector.broadcast %32 : vector<8x1xf32> to vector<8x10xf32>
    %34 = arith.subf %30, %33 : vector<8x10xf32>
    %35 = math.exp %34 : vector<8x10xf32>
    %cst_24 = arith.constant dense<0.000000e+00> : vector<8xf32>
    %36 = vector.multi_reduction <add>, %35, %cst_24 [1] : vector<8x10xf32> to vector<8xf32>
    %37 = vector.shape_cast %36 : vector<8xf32> to vector<8x1xf32>
    %38 = math.log %37 : vector<8x1xf32>
    %39 = vector.broadcast %38 : vector<8x1xf32> to vector<8x10xf32>
    %40 = arith.subf %34, %39 : vector<8x10xf32>
    %c0_25 = arith.constant 0 : index
    %c0_26 = arith.constant 0 : index
    %41 = vector.load %arg10[%c0_25, %c0_26] : memref<8x10xf32, #tpu.memory_space<vmem>>, vector<8x10xf32>
    tpu.vector_store %arg10[%c0_25, %c0_26], %40 {strides = array<i32>} : memref<8x10xf32, #tpu.memory_space<vmem>>, vector<8x10xf32>,
    return
  }
  func.func @transform_0(%arg0: i32) -> (i32, i32) {
    %c0_i32 = arith.constant 0 : i32
    %c0_i32_0 = arith.constant 0 : i32
    return %arg0, %c0_i32 : i32, i32
  }
  func.func @transform_1(%arg0: i32) -> (i32, i32) {
    %c0_i32 = arith.constant 0 : i32
    %c0_i32_0 = arith.constant 0 : i32
    %c0_i32_1 = arith.constant 0 : i32
    return %c0_i32, %c0_i32_0 : i32, i32
  }
  func.func @transform_2(%arg0: i32) -> (i32, i32) {
    %c0_i32 = arith.constant 0 : i32
    %c0_i32_0 = arith.constant 0 : i32
    %c0_i32_1 = arith.constant 0 : i32
    return %c0_i32, %c0_i32_0 : i32, i32
  }
  func.func @transform_3(%arg0: i32) -> (i32, i32) {
    %c0_i32 = arith.constant 0 : i32
    %c0_i32_0 = arith.constant 0 : i32
    %c0_i32_1 = arith.constant 0 : i32
    return %c0_i32, %c0_i32_0 : i32, i32
  }
  func.func @transform_4(%arg0: i32) -> (i32, i32) {
    %c0_i32 = arith.constant 0 : i32
    %c0_i32_0 = arith.constant 0 : i32
    %c0_i32_1 = arith.constant 0 : i32
    return %c0_i32, %c0_i32_0 : i32, i32
  }
  func.func @transform_5(%arg0: i32) -> (i32, i32) {
    %c0_i32 = arith.constant 0 : i32
    %c0_i32_0 = arith.constant 0 : i32
    %c0_i32_1 = arith.constant 0 : i32
    return %c0_i32, %c0_i32_0 : i32, i32
  }
  func.func @transform_6(%arg0: i32) -> (i32, i32) {
    %c0_i32 = arith.constant 0 : i32
    %c0_i32_0 = arith.constant 0 : i32
    %c0_i32_1 = arith.constant 0 : i32
    return %c0_i32, %c0_i32_0 : i32, i32
  }
  func.func @transform_7(%arg0: i32) -> (i32, i32) {
    %c0_i32 = arith.constant 0 : i32
    %c0_i32_0 = arith.constant 0 : i32
    %c0_i32_1 = arith.constant 0 : i32
    return %c0_i32, %c0_i32_0 : i32, i32
  }
  func.func @transform_8(%arg0: i32) -> (i32, i32) {
    %c0_i32 = arith.constant 0 : i32
    %c0_i32_0 = arith.constant 0 : i32
    %c0_i32_1 = arith.constant 0 : i32
    return %c0_i32, %c0_i32_0 : i32, i32
  }
  func.func @transform_9(%arg0: i32) -> (i32, i32) {
    %c0_i32 = arith.constant 0 : i32
    %c0_i32_0 = arith.constant 0 : i32
    return %arg0, %c0_i32 : i32, i32
  }
}

</mosaic_0001>

<llo_original>
// kernel: tpu_custom_call.1
$region0: #{tpu_custom_call.1}
  #allocation0 [shape = 'u32[]', space=smem, size = 0x4, offset = 0x4, fixed_abs, tag = 'smem constant byte address 0x4 - core index']
  #allocation1 [shape = 'u32[144,128]{1,0:T(1,128)}', space=vmem, size = 0x12000, scoped, tag = 'internal scratch']
  %s0 = inlined_call_operand.hbm [shape: f32[8,784], index: 0, kind: input, shape index: {}]
  %s1 = inlined_call_operand.hbm [shape: bf16[784,256], index: 1, kind: input, shape index: {}]
  %s2 = inlined_call_operand.vmem [shape: f32[1,256], index: 2, kind: input, shape index: {}]
  %s3 = inlined_call_operand.vmem [shape: bf16[256,128], index: 3, kind: input, shape index: {}]
  %s4 = inlined_call_operand.vmem [shape: f32[1,128], index: 4, kind: input, shape index: {}]
  %s5 = inlined_call_operand.vmem [shape: bf16[128,64], index: 5, kind: input, shape index: {}]
  %s6 = inlined_call_operand.vmem [shape: f32[1,64], index: 6, kind: input, shape index: {}]
  %s7 = inlined_call_operand.vmem [shape: bf16[64,10], index: 7, kind: input, shape index: {}]
  %s8 = inlined_call_operand.vmem [shape: f32[1,10], index: 8, kind: input, shape index: {}]
  %s9 = inlined_call_operand.hbm [shape: f32[8,10], index: 9, kind: output, shape index: {}]
  %s10 = sld [smem:[#allocation0]]
  $region54: #{tpu_custom_call.1} parent=0
    _
  %s12 = ssub.s32 1, %s10
  %s13 = scalar_select 0, %s12, %s10
  $region1: #{tpu_custom_call.1} parent=0
    #allocation2 [shape = 'u8[28672]{0}', space=vmem, size = 0x7000, scoped, tag = 'input window, operand 0, single buffered']
    #allocation3 [shape = 's32[1]{0}', space=sflag, size = 0x4, scoped, tag = 'scoped memory for tpu_custom_call.1']
    #allocation4 [shape = 's32[1]{0}', space=sflag, size = 0x4, scoped, tag = 'scoped memory for tpu_custom_call.1']
    #allocation5 [shape = 'u8[401408]{0}', space=vmem, size = 0x62000, scoped, tag = 'input window, operand 1, single buffered']
    #allocation6 [shape = 's32[1]{0}', space=sflag, size = 0x4, scoped, tag = 'scoped memory for tpu_custom_call.1']
    #allocation7 [shape = 'u8[4096]{0}', space=vmem, size = 0x1000, scoped, tag = 'output window, operand 0, single buffered']
    %14 = vsyncpa [#allocation3], 0
    %15 = vsyncpa [#allocation6], 0
    %16 = vsyncpa [#allocation4], 0
    // Predicated region
    $region2: #{tpu_custom_call.1} parent=1 // pred_check
      _
    $region3: #{tpu_custom_call.1} parent=1 // pred_check_branch
      %18 = sbr.rel (0) target = $region5
    $region4: #{tpu_custom_call.1} parent=1 // pred_region
      %s20 = ssub.s32 896, 896
      %21 = vsyncadd [#allocation3], %s20
      %s23 = sshll.u32 [#allocation2], 4
      %s24 = int_to_ptr.vmem [resolvable:$true] %s23
      %26 = dma.hbm_to_vmem [thread:$0]  %s0, 896, %s24, [#allocation3]
    $region5: #{tpu_custom_call.1} parent=1 // pred_fallthru
      _
    // Predicated region
    $region6: #{tpu_custom_call.1} parent=1 // pred_check
      _
    $region7: #{tpu_custom_call.1} parent=1 // pred_check_branch
      %28 = sbr.rel (0) target = $region9
    $region8: #{tpu_custom_call.1} parent=1 // pred_region
      %s30 = ssub.s32 12544, 12544
      %31 = vsyncadd [#allocation6], %s30
      %s32 = sshll.u32 [#allocation5], 4
      %s33 = int_to_ptr.vmem [resolvable:$true] %s32
      %38 = dma.hbm_to_vmem [thread:$0]  %s1, 12544, %s33, [#allocation6], 128, 128, 8
    $region9: #{tpu_custom_call.1} parent=1 // pred_fallthru
      _
    // Predicated region
    $region10: #{tpu_custom_call.1} parent=1 // pred_check
      _
    $region11: #{tpu_custom_call.1} parent=1 // pred_check_branch
      %40 = sbr.rel (0) target = $region13
    $region12: #{tpu_custom_call.1} parent=1 // pred_region
      _
    $region13: #{tpu_custom_call.1} parent=1 // pred_fallthru
      _
    // Predicated region
    $region14: #{tpu_custom_call.1} parent=1 // pred_check
      _
    $region15: #{tpu_custom_call.1} parent=1 // pred_check_branch
      %42 = sbr.rel (0) target = $region17
    $region16: #{tpu_custom_call.1} parent=1 // pred_region
      _
    $region17: #{tpu_custom_call.1} parent=1 // pred_fallthru
      _
    // Predicated region
    $region18: #{tpu_custom_call.1} parent=1 // pred_check
      _
    $region19: #{tpu_custom_call.1} parent=1 // pred_check_branch
      %44 = sbr.rel (0) target = $region21
    $region20: #{tpu_custom_call.1} parent=1 // pred_region
      _
    $region21: #{tpu_custom_call.1} parent=1 // pred_fallthru
      _
    // Predicated region
    $region22: #{tpu_custom_call.1} parent=1 // pred_check
      _
    $region23: #{tpu_custom_call.1} parent=1 // pred_check_branch
      %46 = sbr.rel (0) target = $region25
    $region24: #{tpu_custom_call.1} parent=1 // pred_region
      _
    $region25: #{tpu_custom_call.1} parent=1 // pred_fallthru
      _
    // Predicated region
    $region26: #{tpu_custom_call.1} parent=1 // pred_check
      _
    $region27: #{tpu_custom_call.1} parent=1 // pred_check_branch
      %48 = sbr.rel (0) target = $region29
    $region28: #{tpu_custom_call.1} parent=1 // pred_region
      _
    $region29: #{tpu_custom_call.1} parent=1 // pred_fallthru
      _
    // Predicated region
    $region30: #{tpu_custom_call.1} parent=1 // pred_check
      _
    $region31: #{tpu_custom_call.1} parent=1 // pred_check_branch
      %50 = sbr.rel (0) target = $region33
    $region32: #{tpu_custom_call.1} parent=1 // pred_region
      _
    $region33: #{tpu_custom_call.1} parent=1 // pred_fallthru
      _
    // Predicated region
    $region34: #{tpu_custom_call.1} parent=1 // pred_check
      _
    $region35: #{tpu_custom_call.1} parent=1 // pred_check_branch
      %52 = sbr.rel (0) target = $region37
    $region36: #{tpu_custom_call.1} parent=1 // pred_region
      _
    $region37: #{tpu_custom_call.1} parent=1 // pred_fallthru
      _
    // Predicated region
    $region38: #{tpu_custom_call.1} parent=1 // pred_check
      _
    $region39: #{tpu_custom_call.1} parent=1 // pred_check_branch
      %54 = sbr.rel (0) target = $region41
    $region40: #{tpu_custom_call.1} parent=1 // pred_region
      %55 = dma.done [#allocation3], 896
    $region41: #{tpu_custom_call.1} parent=1 // pred_fallthru
      _
    // Predicated region
    $region42: #{tpu_custom_call.1} parent=1 // pred_check
      _
    $region43: #{tpu_custom_call.1} parent=1 // pred_check_branch
      %57 = sbr.rel (0) target = $region45
    $region44: #{tpu_custom_call.1} parent=1 // pred_region
      %58 = dma.done [#allocation6], 12544
    $region45: #{tpu_custom_call.1} parent=1 // pred_fallthru
      _
    %v60 = vld [vmem:[#allocation2] sm:$0xff]
    %v61 = vld [vmem:[#allocation2 + $0x8] sm:$0xff]
    %v62 = vld [vmem:[#allocation2 + $0x10] sm:$0xff]
    %v63 = vld [vmem:[#allocation2 + $0x18] sm:$0xff]
    %v64 = vld [vmem:[#allocation2 + $0x20] sm:$0xff]
    %v65 = vld [vmem:[#allocation2 + $0x28] sm:$0xff]
    %v66 = vld [vmem:[#allocation2 + $0x30] sm:$0xff]
    %v67 = vpack.c.bf16 %v60, %v60
    %v68 = vpack.c.bf16 %v61, %v61
    %v69 = vpack.c.bf16 %v62, %v62
    %v70 = vpack.c.bf16 %v63, %v63
    %v71 = vpack.c.bf16 %v64, %v64
    %v72 = vpack.c.bf16 %v65, %v65
    %v73 = vpack.c.bf16 %v66, %v66
    %v74 = vld [vmem:[#allocation5] sm:$0xff]
    %v75 = vld [vmem:[#allocation5 + $0x8] sm:$0xff]
    %v76 = vld [vmem:[#allocation5 + $0x10] sm:$0xff]
    %v77 = vld [vmem:[#allocation5 + $0x18] sm:$0xff]
    %v78 = vld [vmem:[#allocation5 + $0x20] sm:$0xff]
    %v79 = vld [vmem:[#allocation5 + $0x28] sm:$0xff]
    %v80 = vld [vmem:[#allocation5 + $0x30] sm:$0xff]
    %v81 = vld [vmem:[#allocation5 + $0x38] sm:$0xff]
    %v82 = vld [vmem:[#allocation5 + $0x40] sm:$0xff]
    %v83 = vld [vmem:[#allocation5 + $0x48] sm:$0xff]
    %v84 = vld [vmem:[#allocation5 + $0x50] sm:$0xff]
    %v85 = vld [vmem:[#allocation5 + $0x58] sm:$0xff]
    %v86 = vld [vmem:[#allocation5 + $0x60] sm:$0xff]
    %v87 = vld [vmem:[#allocation5 + $0x68] sm:$0xff]
    %v88 = vld [vmem:[#allocation5 + $0x70] sm:$0xff]
    %v89 = vld [vmem:[#allocation5 + $0x78] sm:$0xff]
    %v90 = vld [vmem:[#allocation5 + $0x80] sm:$0xff]
    %v91 = vld [vmem:[#allocation5 + $0x88] sm:$0xff]
    %v92 = vld [vmem:[#allocation5 + $0x90] sm:$0xff]
    %v93 = vld [vmem:[#allocation5 + $0x98] sm:$0xff]
    %v94 = vld [vmem:[#allocation5 + $0xa0] sm:$0xff]
    %v95 = vld [vmem:[#allocation5 + $0xa8] sm:$0xff]
    %v96 = vld [vmem:[#allocation5 + $0xb0] sm:$0xff]
    %v97 = vld [vmem:[#allocation5 + $0xb8] sm:$0xff]
    %v98 = vld [vmem:[#allocation5 + $0xc0] sm:$0xff]
    %v99 = vld [vmem:[#allocation5 + $0xc8] sm:$0xff]
    %v100 = vld [vmem:[#allocation5 + $0xd0] sm:$0xff]
    %v101 = vld [vmem:[#allocation5 + $0xd8] sm:$0xff]
    %v102 = vld [vmem:[#allocation5 + $0xe0] sm:$0xff]
    %v103 = vld [vmem:[#allocation5 + $0xe8] sm:$0xff]
    %v104 = vld [vmem:[#allocation5 + $0xf0] sm:$0xff]
    %v105 = vld [vmem:[#allocation5 + $0xf8] sm:$0xff]
    %v106 = vld [vmem:[#allocation5 + $0x100] sm:$0xff]
    %v107 = vld [vmem:[#allocation5 + $0x108] sm:$0xff]
    %v108 = vld [vmem:[#allocation5 + $0x110] sm:$0xff]
    %v109 = vld [vmem:[#allocation5 + $0x118] sm:$0xff]
    %v110 = vld [vmem:[#allocation5 + $0x120] sm:$0xff]
    %v111 = vld [vmem:[#allocation5 + $0x128] sm:$0xff]
    %v112 = vld [vmem:[#allocation5 + $0x130] sm:$0xff]
    %v113 = vld [vmem:[#allocation5 + $0x138] sm:$0xff]
    %v114 = vld [vmem:[#allocation5 + $0x140] sm:$0xff]
    %v115 = vld [vmem:[#allocation5 + $0x148] sm:$0xff]
    %v116 = vld [vmem:[#allocation5 + $0x150] sm:$0xff]
    %v117 = vld [vmem:[#allocation5 + $0x158] sm:$0xff]
    %v118 = vld [vmem:[#allocation5 + $0x160] sm:$0xff]
    %v119 = vld [vmem:[#allocation5 + $0x168] sm:$0xff]
    %v120 = vld [vmem:[#allocation5 + $0x170] sm:$0xff]
    %v121 = vld [vmem:[#allocation5 + $0x178] sm:$0xff]
    %v122 = vld [vmem:[#allocation5 + $0x180] sm:$0xff]
    %v123 = vld [vmem:[#allocation5 + $0x188] sm:$0xff]
    %v124 = vld [vmem:[#allocation5 + $0x190] sm:$0xff]
    %v125 = vld [vmem:[#allocation5 + $0x198] sm:$0xff]
    %v126 = vld [vmem:[#allocation5 + $0x1a0] sm:$0xff]
    %v127 = vld [vmem:[#allocation5 + $0x1a8] sm:$0xff]
    %v128 = vld [vmem:[#allocation5 + $0x1b0] sm:$0xff]
    %v129 = vld [vmem:[#allocation5 + $0x1b8] sm:$0xff]
    %v130 = vld [vmem:[#allocation5 + $0x1c0] sm:$0xff]
    %v131 = vld [vmem:[#allocation5 + $0x1c8] sm:$0xff]
    %v132 = vld [vmem:[#allocation5 + $0x1d0] sm:$0xff]
    %v133 = vld [vmem:[#allocation5 + $0x1d8] sm:$0xff]
    %v134 = vld [vmem:[#allocation5 + $0x1e0] sm:$0xff]
    %v135 = vld [vmem:[#allocation5 + $0x1e8] sm:$0xff]
    %v136 = vld [vmem:[#allocation5 + $0x1f0] sm:$0xff]
    %v137 = vld [vmem:[#allocation5 + $0x1f8] sm:$0xff]
    %v138 = vld [vmem:[#allocation5 + $0x200] sm:$0xff]
    %v139 = vld [vmem:[#allocation5 + $0x208] sm:$0xff]
    %v140 = vld [vmem:[#allocation5 + $0x210] sm:$0xff]
    %v141 = vld [vmem:[#allocation5 + $0x218] sm:$0xff]
    %v142 = vld [vmem:[#allocation5 + $0x220] sm:$0xff]
    %v143 = vld [vmem:[#allocation5 + $0x228] sm:$0xff]
    %v144 = vld [vmem:[#allocation5 + $0x230] sm:$0xff]
    %v145 = vld [vmem:[#allocation5 + $0x238] sm:$0xff]
    %v146 = vld [vmem:[#allocation5 + $0x240] sm:$0xff]
    %v147 = vld [vmem:[#allocation5 + $0x248] sm:$0xff]
    %v148 = vld [vmem:[#allocation5 + $0x250] sm:$0xff]
    %v149 = vld [vmem:[#allocation5 + $0x258] sm:$0xff]
    %v150 = vld [vmem:[#allocation5 + $0x260] sm:$0xff]
    %v151 = vld [vmem:[#allocation5 + $0x268] sm:$0xff]
    %v152 = vld [vmem:[#allocation5 + $0x270] sm:$0xff]
    %v153 = vld [vmem:[#allocation5 + $0x278] sm:$0xff]
    %v154 = vld [vmem:[#allocation5 + $0x280] sm:$0xff]
    %v155 = vld [vmem:[#allocation5 + $0x288] sm:$0xff]
    %v156 = vld [vmem:[#allocation5 + $0x290] sm:$0xff]
    %v157 = vld [vmem:[#allocation5 + $0x298] sm:$0xff]
    %v158 = vld [vmem:[#allocation5 + $0x2a0] sm:$0xff]
    %v159 = vld [vmem:[#allocation5 + $0x2a8] sm:$0xff]
    %v160 = vld [vmem:[#allocation5 + $0x2b0] sm:$0xff]
    %v161 = vld [vmem:[#allocation5 + $0x2b8] sm:$0xff]
    %v162 = vld [vmem:[#allocation5 + $0x2c0] sm:$0xff]
    %v163 = vld [vmem:[#allocation5 + $0x2c8] sm:$0xff]
    %v164 = vld [vmem:[#allocation5 + $0x2d0] sm:$0xff]
    %v165 = vld [vmem:[#allocation5 + $0x2d8] sm:$0xff]
    %v166 = vld [vmem:[#allocation5 + $0x2e0] sm:$0xff]
    %v167 = vld [vmem:[#allocation5 + $0x2e8] sm:$0xff]
    %v168 = vld [vmem:[#allocation5 + $0x2f0] sm:$0xff]
    %v169 = vld [vmem:[#allocation5 + $0x2f8] sm:$0xff]
    %v170 = vld [vmem:[#allocation5 + $0x300] sm:$0xff]
    %v171 = vld [vmem:[#allocation5 + $0x308] sm:$0xff]
    %v172 = vld [vmem:[%s2] sm:$0x3]
    %v174 = vlaneseq
    %v175 = vshrl.u32 %v174, 7
    %v176 = vsub.s32 0, %v175
    %v177 = vrot.slane %v172, %v176
    %v178 = vlaneseq
    %v179 = vshrl.u32 %v178, 7
    %v180 = vsub.s32 1, %v179
    %v181 = vrot.slane %v172, %v180
    %v282 = vunpack.c.l.b16 %v74
    %v283 = vunpack.c.h.b16 %v74
    %v284 = vunpack.c.l.b16 %v75
    %v285 = vunpack.c.h.b16 %v75
    %v286 = vunpack.c.l.b16 %v76
    %v287 = vunpack.c.h.b16 %v76
    %v288 = vunpack.c.l.b16 %v77
    %v289 = vunpack.c.h.b16 %v77
    %v290 = vunpack.c.l.b16 %v78
    %v291 = vunpack.c.h.b16 %v78
    %v292 = vunpack.c.l.b16 %v79
    %v293 = vunpack.c.h.b16 %v79
    %v294 = vunpack.c.l.b16 %v80
    %v295 = vunpack.c.h.b16 %v80
    %v296 = vunpack.c.l.b16 %v81
    %v297 = vunpack.c.h.b16 %v81
    %v298 = vunpack.c.l.b16 %v82
    %v299 = vunpack.c.h.b16 %v82
    %v300 = vunpack.c.l.b16 %v83
    %v301 = vunpack.c.h.b16 %v83
    %v302 = vunpack.c.l.b16 %v84
    %v303 = vunpack.c.h.b16 %v84
    %v304 = vunpack.c.l.b16 %v85
    %v305 = vunpack.c.h.b16 %v85
    %v306 = vunpack.c.l.b16 %v86
    %v307 = vunpack.c.h.b16 %v86
    %v308 = vunpack.c.l.b16 %v87
    %v309 = vunpack.c.h.b16 %v87
    %v310 = vunpack.c.l.b16 %v88
    %v311 = vunpack.c.h.b16 %v88
    %v312 = vunpack.c.l.b16 %v89
    %v313 = vunpack.c.h.b16 %v89
    %v314 = vunpack.c.l.b16 %v90
    %v315 = vunpack.c.h.b16 %v90
    %v316 = vunpack.c.l.b16 %v91
    %v317 = vunpack.c.h.b16 %v91
    %v318 = vunpack.c.l.b16 %v92
    %v319 = vunpack.c.h.b16 %v92
    %v320 = vunpack.c.l.b16 %v93
    %v321 = vunpack.c.h.b16 %v93
    %v322 = vunpack.c.l.b16 %v94
    %v323 = vunpack.c.h.b16 %v94
    %v324 = vunpack.c.l.b16 %v95
    %v325 = vunpack.c.h.b16 %v95
    %v326 = vunpack.c.l.b16 %v96
    %v327 = vunpack.c.h.b16 %v96
    %v328 = vunpack.c.l.b16 %v97
    %v329 = vunpack.c.h.b16 %v97
    %v330 = vunpack.c.l.b16 %v98
    %v331 = vunpack.c.h.b16 %v98
    %v332 = vunpack.c.l.b16 %v99
    %v333 = vunpack.c.h.b16 %v99
    %v334 = vunpack.c.l.b16 %v100
    %v335 = vunpack.c.h.b16 %v100
    %v336 = vunpack.c.l.b16 %v101
    %v337 = vunpack.c.h.b16 %v101
    %v338 = vunpack.c.l.b16 %v102
    %v339 = vunpack.c.h.b16 %v102
    %v340 = vunpack.c.l.b16 %v103
    %v341 = vunpack.c.h.b16 %v103
    %v342 = vunpack.c.l.b16 %v104
    %v343 = vunpack.c.h.b16 %v104
    %v344 = vunpack.c.l.b16 %v105
    %v345 = vunpack.c.h.b16 %v105
    %v346 = vunpack.c.l.b16 %v106
    %v347 = vunpack.c.h.b16 %v106
    %v348 = vunpack.c.l.b16 %v107
    %v349 = vunpack.c.h.b16 %v107
    %v350 = vunpack.c.l.b16 %v108
    %v351 = vunpack.c.h.b16 %v108
    %v352 = vunpack.c.l.b16 %v109
    %v353 = vunpack.c.h.b16 %v109
    %v354 = vunpack.c.l.b16 %v110
    %v355 = vunpack.c.h.b16 %v110
    %v356 = vunpack.c.l.b16 %v111
    %v357 = vunpack.c.h.b16 %v111
    %v358 = vunpack.c.l.b16 %v112
    %v359 = vunpack.c.h.b16 %v112
    %v360 = vunpack.c.l.b16 %v113
    %v361 = vunpack.c.h.b16 %v113
    %v362 = vunpack.c.l.b16 %v114
    %v363 = vunpack.c.h.b16 %v114
    %v364 = vunpack.c.l.b16 %v115
    %v365 = vunpack.c.h.b16 %v115
    %v366 = vunpack.c.l.b16 %v116
    %v367 = vunpack.c.h.b16 %v116
    %v368 = vunpack.c.l.b16 %v117
    %v369 = vunpack.c.h.b16 %v117
    %v370 = vunpack.c.l.b16 %v118
    %v371 = vunpack.c.h.b16 %v118
    %v372 = vunpack.c.l.b16 %v119
    %v373 = vunpack.c.h.b16 %v119
    %v374 = vunpack.c.l.b16 %v120
    %v375 = vunpack.c.h.b16 %v120
    %v376 = vunpack.c.l.b16 %v121
    %v377 = vunpack.c.h.b16 %v121
    %v378 = vunpack.c.l.b16 %v122
    %v379 = vunpack.c.h.b16 %v122
    %v380 = vunpack.c.l.b16 %v123
    %v381 = vunpack.c.h.b16 %v123
    %v382 = vunpack.c.l.b16 %v124
    %v383 = vunpack.c.h.b16 %v124
    %v384 = vunpack.c.l.b16 %v125
    %v385 = vunpack.c.h.b16 %v125
    %v386 = vunpack.c.l.b16 %v126
    %v387 = vunpack.c.h.b16 %v126
    %v388 = vunpack.c.l.b16 %v127
    %v389 = vunpack.c.h.b16 %v127
    %v390 = vunpack.c.l.b16 %v128
    %v391 = vunpack.c.h.b16 %v128
    %v392 = vunpack.c.l.b16 %v129
    %v393 = vunpack.c.h.b16 %v129
    %v394 = vunpack.c.l.b16 %v130
    %v395 = vunpack.c.h.b16 %v130
    %v396 = vunpack.c.l.b16 %v131
    %v397 = vunpack.c.h.b16 %v131
    %v398 = vunpack.c.l.b16 %v132
    %v399 = vunpack.c.h.b16 %v132
    %v400 = vunpack.c.l.b16 %v133
    %v401 = vunpack.c.h.b16 %v133
    %v402 = vunpack.c.l.b16 %v134
    %v403 = vunpack.c.h.b16 %v134
    %v404 = vunpack.c.l.b16 %v135
    %v405 = vunpack.c.h.b16 %v135
    %v406 = vunpack.c.l.b16 %v136
    %v407 = vunpack.c.h.b16 %v136
    %v408 = vunpack.c.l.b16 %v137
    %v409 = vunpack.c.h.b16 %v137
    %v410 = vunpack.c.l.b16 %v138
    %v411 = vunpack.c.h.b16 %v138
    %v412 = vunpack.c.l.b16 %v139
    %v413 = vunpack.c.h.b16 %v139
    %v414 = vunpack.c.l.b16 %v140
    %v415 = vunpack.c.h.b16 %v140
    %v416 = vunpack.c.l.b16 %v141
    %v417 = vunpack.c.h.b16 %v141
    %v418 = vunpack.c.l.b16 %v142
    %v419 = vunpack.c.h.b16 %v142
    %v420 = vunpack.c.l.b16 %v143
    %v421 = vunpack.c.h.b16 %v143
    %v422 = vunpack.c.l.b16 %v144
    %v423 = vunpack.c.h.b16 %v144
    %v424 = vunpack.c.l.b16 %v145
    %v425 = vunpack.c.h.b16 %v145
    %v426 = vunpack.c.l.b16 %v146
    %v427 = vunpack.c.h.b16 %v146
    %v428 = vunpack.c.l.b16 %v147
    %v429 = vunpack.c.h.b16 %v147
    %v430 = vunpack.c.l.b16 %v148
    %v431 = vunpack.c.h.b16 %v148
    %v432 = vunpack.c.l.b16 %v149
    %v433 = vunpack.c.h.b16 %v149
    %v434 = vunpack.c.l.b16 %v150
    %v435 = vunpack.c.h.b16 %v150
    %v436 = vunpack.c.l.b16 %v151
    %v437 = vunpack.c.h.b16 %v151
    %v438 = vunpack.c.l.b16 %v152
    %v439 = vunpack.c.h.b16 %v152
    %v440 = vunpack.c.l.b16 %v153
    %v441 = vunpack.c.h.b16 %v153
    %v442 = vunpack.c.l.b16 %v154
    %v443 = vunpack.c.h.b16 %v154
    %v444 = vunpack.c.l.b16 %v155
    %v445 = vunpack.c.h.b16 %v155
    %v446 = vunpack.c.l.b16 %v156
    %v447 = vunpack.c.h.b16 %v156
    %v448 = vunpack.c.l.b16 %v157
    %v449 = vunpack.c.h.b16 %v157
    %v450 = vunpack.c.l.b16 %v158
    %v451 = vunpack.c.h.b16 %v158
    %v452 = vunpack.c.l.b16 %v159
    %v453 = vunpack.c.h.b16 %v159
    %v454 = vunpack.c.l.b16 %v160
    %v455 = vunpack.c.h.b16 %v160
    %v456 = vunpack.c.l.b16 %v161
    %v457 = vunpack.c.h.b16 %v161
    %v458 = vunpack.c.l.b16 %v162
    %v459 = vunpack.c.h.b16 %v162
    %v460 = vunpack.c.l.b16 %v163
    %v461 = vunpack.c.h.b16 %v163
    %v462 = vunpack.c.l.b16 %v164
    %v463 = vunpack.c.h.b16 %v164
    %v464 = vunpack.c.l.b16 %v165
    %v465 = vunpack.c.h.b16 %v165
    %v466 = vunpack.c.l.b16 %v166
    %v467 = vunpack.c.h.b16 %v166
    %v468 = vunpack.c.l.b16 %v167
    %v469 = vunpack.c.h.b16 %v167
    %v470 = vunpack.c.l.b16 %v168
    %v471 = vunpack.c.h.b16 %v168
    %v472 = vunpack.c.l.b16 %v169
    %v473 = vunpack.c.h.b16 %v169
    %v474 = vunpack.c.l.b16 %v170
    %v475 = vunpack.c.h.b16 %v170
    %v476 = vunpack.c.l.b16 %v171
    %v477 = vunpack.c.h.b16 %v171
    %v478 = vpack.c.b16 %v284, %v282
    %v479 = vpack.c.b16 %v285, %v283
    %v480 = vpack.c.b16 %v288, %v286
    %v481 = vpack.c.b16 %v289, %v287
    %v482 = vpack.c.b16 %v292, %v290
    %v483 = vpack.c.b16 %v293, %v291
    %v484 = vpack.c.b16 %v296, %v294
    %v485 = vpack.c.b16 %v297, %v295
    %v486 = vpack.c.b16 %v300, %v298
    %v487 = vpack.c.b16 %v301, %v299
    %v488 = vpack.c.b16 %v304, %v302
    %v489 = vpack.c.b16 %v305, %v303
    %v490 = vpack.c.b16 %v308, %v306
    %v491 = vpack.c.b16 %v309, %v307
    %v492 = vpack.c.b16 %v312, %v310
    %v493 = vpack.c.b16 %v313, %v311
    %v494 = vpack.c.b16 %v316, %v314
    %v495 = vpack.c.b16 %v317, %v315
    %v496 = vpack.c.b16 %v320, %v318
    %v497 = vpack.c.b16 %v321, %v319
    %v498 = vpack.c.b16 %v324, %v322
    %v499 = vpack.c.b16 %v325, %v323
    %v500 = vpack.c.b16 %v328, %v326
    %v501 = vpack.c.b16 %v329, %v327
    %v502 = vpack.c.b16 %v332, %v330
    %v503 = vpack.c.b16 %v333, %v331
    %v504 = vpack.c.b16 %v336, %v334
    %v505 = vpack.c.b16 %v337, %v335
    %v506 = vpack.c.b16 %v340, %v338
    %v507 = vpack.c.b16 %v341, %v339
    %v508 = vpack.c.b16 %v344, %v342
    %v509 = vpack.c.b16 %v345, %v343
    %v510 = vpack.c.b16 %v348, %v346
    %v511 = vpack.c.b16 %v349, %v347
    %v512 = vpack.c.b16 %v352, %v350
    %v513 = vpack.c.b16 %v353, %v351
    %v514 = vpack.c.b16 %v356, %v354
    %v515 = vpack.c.b16 %v357, %v355
    %v516 = vpack.c.b16 %v360, %v358
    %v517 = vpack.c.b16 %v361, %v359
    %v518 = vpack.c.b16 %v364, %v362
    %v519 = vpack.c.b16 %v365, %v363
    %v520 = vpack.c.b16 %v368, %v366
    %v521 = vpack.c.b16 %v369, %v367
    %v522 = vpack.c.b16 %v372, %v370
    %v523 = vpack.c.b16 %v373, %v371
    %v524 = vpack.c.b16 %v376, %v374
    %v525 = vpack.c.b16 %v377, %v375
    %v526 = vpack.c.b16 %v380, %v378
    %v527 = vpack.c.b16 %v381, %v379
    %v528 = vpack.c.b16 %v384, %v382
    %v529 = vpack.c.b16 %v385, %v383
    %v530 = vpack.c.b16 %v388, %v386
    %v531 = vpack.c.b16 %v389, %v387
    %v532 = vpack.c.b16 %v392, %v390
    %v533 = vpack.c.b16 %v393, %v391
    %v534 = vpack.c.b16 %v396, %v394
    %v535 = vpack.c.b16 %v397, %v395
    %v536 = vpack.c.b16 %v400, %v398
    %v537 = vpack.c.b16 %v401, %v399
    %v538 = vpack.c.b16 %v404, %v402
    %v539 = vpack.c.b16 %v405, %v403
    %v540 = vpack.c.b16 %v408, %v406
    %v541 = vpack.c.b16 %v409, %v407
    %v542 = vpack.c.b16 %v412, %v410
    %v543 = vpack.c.b16 %v413, %v411
    %v544 = vpack.c.b16 %v416, %v414
    %v545 = vpack.c.b16 %v417, %v415
    %v546 = vpack.c.b16 %v420, %v418
    %v547 = vpack.c.b16 %v421, %v419
    %v548 = vpack.c.b16 %v424, %v422
    %v549 = vpack.c.b16 %v425, %v423
    %v550 = vpack.c.b16 %v428, %v426
    %v551 = vpack.c.b16 %v429, %v427
    %v552 = vpack.c.b16 %v432, %v430
    %v553 = vpack.c.b16 %v433, %v431
    %v554 = vpack.c.b16 %v436, %v434
    %v555 = vpack.c.b16 %v437, %v435
    %v556 = vpack.c.b16 %v440, %v438
    %v557 = vpack.c.b16 %v441, %v439
    %v558 = vpack.c.b16 %v444, %v442
    %v559 = vpack.c.b16 %v445, %v443
    %v560 = vpack.c.b16 %v448, %v446
    %v561 = vpack.c.b16 %v449, %v447
    %v562 = vpack.c.b16 %v452, %v450
    %v563 = vpack.c.b16 %v453, %v451
    %v564 = vpack.c.b16 %v456, %v454
    %v565 = vpack.c.b16 %v457, %v455
    %v566 = vpack.c.b16 %v460, %v458
    %v567 = vpack.c.b16 %v461, %v459
    %v568 = vpack.c.b16 %v464, %v462
    %v569 = vpack.c.b16 %v465, %v463
    %v570 = vpack.c.b16 %v468, %v466
    %v571 = vpack.c.b16 %v469, %v467
    %v572 = vpack.c.b16 %v472, %v470
    %v573 = vpack.c.b16 %v473, %v471
    %v574 = vpack.c.b16 %v476, %v474
    %v575 = vpack.c.b16 %v477, %v475
    %vm674 = vcmask 130048
    %v676 = vsel %vm674, %v73, 0
    %678 = vmatprep.subr.bf16.mxu0 %v479
    %679 = vmatpush1.bf16.msra.mxu0 %v478
    %680 = vmatprep.subr.bf16.mxu0 %v481
    %681 = vmatpush1.bf16.msra.mxu0 %v480
    %682 = vmatprep.subr.bf16.mxu0 %v483
    %683 = vmatpush1.bf16.msra.mxu0 %v482
    %684 = vmatprep.subr.bf16.mxu0 %v485
    %685 = vmatpush1.bf16.msra.mxu0 %v484
    %686 = vmatprep.subr.bf16.mxu0 %v487
    %687 = vmatpush1.bf16.msra.mxu0 %v486
    %688 = vmatprep.subr.bf16.mxu0 %v489
    %689 = vmatpush1.bf16.msra.mxu0 %v488
    %690 = vmatprep.subr.bf16.mxu0 %v491
    %691 = vmatpush1.bf16.msra.mxu0 %v490
    %692 = vmatprep.subr.bf16.mxu0 %v493
    %693 = vmatpush1.bf16.msra.mxu0 %v492
    %694 = vmatprep.subr.bf16.mxu0 %v495
    %695 = vmatpush1.bf16.msra.mxu0 %v494
    %696 = vmatprep.subr.bf16.mxu0 %v497
    %697 = vmatpush1.bf16.msra.mxu0 %v496
    %698 = vmatprep.subr.bf16.mxu0 %v499
    %699 = vmatpush1.bf16.msra.mxu0 %v498
    %700 = vmatprep.subr.bf16.mxu0 %v501
    %701 = vmatpush1.bf16.msra.mxu0 %v500
    %702 = vmatprep.subr.bf16.mxu0 %v503
    %703 = vmatpush1.bf16.msra.mxu0 %v502
    %704 = vmatprep.subr.bf16.mxu0 %v505
    %705 = vmatpush1.bf16.msra.mxu0 %v504
    %706 = vmatprep.subr.bf16.mxu0 %v507
    %707 = vmatpush1.bf16.msra.mxu0 %v506
    %708 = vmatprep.subr.bf16.mxu0 %v509
    %709 = vmatpush1.bf16.msra.mxu0 %v508
    %710 = vmatprep.mubr.bf16.mxu0 %v68
    %711 = vmatmul.mubr.bf16.gmra.mrb[0].mxu0 %v67
    %v712 = vpop.f32.mrb[0].mxu0
    %v713 = vadd.f32 %v177, %v712
    %v714 = vpop.f32.mrb[0].mxu0
    %v715 = vadd.f32 %v181, %v714
    %v716 = vpop.f32.mrb[0].mxu0
    %v717 = vpop.f32.mrb[0].mxu0
    %718 = vdwg.mxu0
    %719 = vmatprep.subr.bf16.mxu0 %v511
    %720 = vmatpush1.bf16.msra.mxu0 %v510
    %721 = vmatprep.subr.bf16.mxu0 %v513
    %722 = vmatpush1.bf16.msra.mxu0 %v512
    %723 = vmatprep.subr.bf16.mxu0 %v515
    %724 = vmatpush1.bf16.msra.mxu0 %v514
    %725 = vmatprep.subr.bf16.mxu0 %v517
    %726 = vmatpush1.bf16.msra.mxu0 %v516
    %727 = vmatprep.subr.bf16.mxu0 %v519
    %728 = vmatpush1.bf16.msra.mxu0 %v518
    %729 = vmatprep.subr.bf16.mxu0 %v521
    %730 = vmatpush1.bf16.msra.mxu0 %v520
    %731 = vmatprep.subr.bf16.mxu0 %v523
    %732 = vmatpush1.bf16.msra.mxu0 %v522
    %733 = vmatprep.subr.bf16.mxu0 %v525
    %734 = vmatpush1.bf16.msra.mxu0 %v524
    %735 = vmatprep.subr.bf16.mxu0 %v527
    %736 = vmatpush1.bf16.msra.mxu0 %v526
    %737 = vmatprep.subr.bf16.mxu0 %v529
    %738 = vmatpush1.bf16.msra.mxu0 %v528
    %739 = vmatprep.subr.bf16.mxu0 %v531
    %740 = vmatpush1.bf16.msra.mxu0 %v530
    %741 = vmatprep.subr.bf16.mxu0 %v533
    %742 = vmatpush1.bf16.msra.mxu0 %v532
    %743 = vmatprep.subr.bf16.mxu0 %v535
    %744 = vmatpush1.bf16.msra.mxu0 %v534
    %745 = vmatprep.subr.bf16.mxu0 %v537
    %746 = vmatpush1.bf16.msra.mxu0 %v536
    %747 = vmatprep.subr.bf16.mxu0 %v539
    %748 = vmatpush1.bf16.msra.mxu0 %v538
    %749 = vmatprep.subr.bf16.mxu0 %v541
    %750 = vmatpush1.bf16.msra.mxu0 %v540
    %751 = vmatprep.mubr.bf16.mxu0 %v70
    %752 = vmatmul.mubr.bf16.gmra.mrb[0].mxu0 %v69
    %v753 = vpop.f32.mrb[0].mxu0
    %v754 = vadd.f32 %v713, %v753
    %v755 = vpop.f32.mrb[0].mxu0
    %v756 = vadd.f32 %v715, %v755
    %v757 = vpop.f32.mrb[0].mxu0
    %v758 = vpop.f32.mrb[0].mxu0
    %759 = vdwg.mxu0
    %760 = vmatprep.subr.bf16.mxu0 %v543
    %761 = vmatpush1.bf16.msra.mxu0 %v542
    %762 = vmatprep.subr.bf16.mxu0 %v545
    %763 = vmatpush1.bf16.msra.mxu0 %v544
    %764 = vmatprep.subr.bf16.mxu0 %v547
    %765 = vmatpush1.bf16.msra.mxu0 %v546
    %766 = vmatprep.subr.bf16.mxu0 %v549
    %767 = vmatpush1.bf16.msra.mxu0 %v548
    %768 = vmatprep.subr.bf16.mxu0 %v551
    %769 = vmatpush1.bf16.msra.mxu0 %v550
    %770 = vmatprep.subr.bf16.mxu0 %v553
    %771 = vmatpush1.bf16.msra.mxu0 %v552
    %772 = vmatprep.subr.bf16.mxu0 %v555
    %773 = vmatpush1.bf16.msra.mxu0 %v554
    %774 = vmatprep.subr.bf16.mxu0 %v557
    %775 = vmatpush1.bf16.msra.mxu0 %v556
    %776 = vmatprep.subr.bf16.mxu0 %v559
    %777 = vmatpush1.bf16.msra.mxu0 %v558
    %778 = vmatprep.subr.bf16.mxu0 %v561
    %779 = vmatpush1.bf16.msra.mxu0 %v560
    %780 = vmatprep.subr.bf16.mxu0 %v563
    %781 = vmatpush1.bf16.msra.mxu0 %v562
    %782 = vmatprep.subr.bf16.mxu0 %v565
    %783 = vmatpush1.bf16.msra.mxu0 %v564
    %784 = vmatprep.subr.bf16.mxu0 %v567
    %785 = vmatpush1.bf16.msra.mxu0 %v566
    %786 = vmatprep.subr.bf16.mxu0 %v569
    %787 = vmatpush1.bf16.msra.mxu0 %v568
    %788 = vmatprep.subr.bf16.mxu0 %v571
    %789 = vmatpush1.bf16.msra.mxu0 %v570
    %790 = vmatprep.subr.bf16.mxu0 %v573
    %791 = vmatpush1.bf16.msra.mxu0 %v572
    %792 = vmatprep.mubr.bf16.mxu0 %v72
    %793 = vmatmul.mubr.bf16.gmra.mrb[0].mxu0 %v71
    %v794 = vpop.f32.mrb[0].mxu0
    %v795 = vadd.f32 %v754, %v794
    %v796 = vpop.f32.mrb[0].mxu0
    %v797 = vadd.f32 %v756, %v796
    %v798 = vpop.f32.mrb[0].mxu0
    %v799 = vpop.f32.mrb[0].mxu0
    %800 = vdwg.mxu0
    %801 = vmatprep.subr.bf16.mxu0 %v575
    %802 = vmatpush1.bf16.msra.mxu0 %v574
    %803 = vmatprep.subr.bf16.mxu0 0
    %804 = vmatpush1.bf16.msra.mxu0 0
    %805 = vmatprep.subr.bf16.mxu0 0
    %806 = vmatpush1.bf16.msra.mxu0 0
    %807 = vmatprep.subr.bf16.mxu0 0
    %808 = vmatpush1.bf16.msra.mxu0 0
    %809 = vmatprep.subr.bf16.mxu0 0
    %810 = vmatpush1.bf16.msra.mxu0 0
    %811 = vmatprep.subr.bf16.mxu0 0
    %812 = vmatpush1.bf16.msra.mxu0 0
    %813 = vmatprep.subr.bf16.mxu0 0
    %814 = vmatpush1.bf16.msra.mxu0 0
    %815 = vmatprep.subr.bf16.mxu0 0
    %816 = vmatpush1.bf16.msra.mxu0 0
    %817 = vmatprep.subr.bf16.mxu0 0
    %818 = vmatpush1.bf16.msra.mxu0 0
    %819 = vmatprep.subr.bf16.mxu0 0
    %820 = vmatpush1.bf16.msra.mxu0 0
    %821 = vmatprep.subr.bf16.mxu0 0
    %822 = vmatpush1.bf16.msra.mxu0 0
    %823 = vmatprep.subr.bf16.mxu0 0
    %824 = vmatpush1.bf16.msra.mxu0 0
    %825 = vmatprep.subr.bf16.mxu0 0
    %826 = vmatpush1.bf16.msra.mxu0 0
    %827 = vmatprep.subr.bf16.mxu0 0
    %828 = vmatpush1.bf16.msra.mxu0 0
    %829 = vmatprep.subr.bf16.mxu0 0
    %830 = vmatpush1.bf16.msra.mxu0 0
    %831 = vmatprep.subr.bf16.mxu0 0
    %832 = vmatpush1.bf16.msra.mxu0 0
    %833 = vmatprep.mubr.bf16.mxu0 0
    %834 = vmatmul.mubr.bf16.gmra.mrb[0].mxu0 %v676
    %v835 = vpop.f32.mrb[0].mxu0
    %v836 = vadd.f32 %v795, %v835
    %v837 = vpop.f32.mrb[0].mxu0
    %v838 = vadd.f32 %v797, %v837
    %v839 = vpop.f32.mrb[0].mxu0
    %v840 = vpop.f32.mrb[0].mxu0
    %841 = vdwg.mxu0
    %v842 = vmax.f32 %v836, 0.0
    %v843 = vmax.f32 %v838, 0.0
    %v844 = vpack.c.bf16 %v842, %v842
    %v845 = vpack.c.bf16 %v843, %v843
    %v846 = vld [vmem:[%s3] sm:$0xf]
    %v847 = vld [vmem:[%s3 + $0x4] sm:$0xf]
    %v848 = vld [vmem:[%s3 + $0x8] sm:$0xf]
    %v849 = vld [vmem:[%s3 + $0xc] sm:$0xf]
    %v850 = vld [vmem:[%s3 + $0x10] sm:$0xf]
    %v851 = vld [vmem:[%s3 + $0x14] sm:$0xf]
    %v852 = vld [vmem:[%s3 + $0x18] sm:$0xf]
    %v853 = vld [vmem:[%s3 + $0x1c] sm:$0xf]
    %v854 = vld [vmem:[%s3 + $0x20] sm:$0xf]
    %v855 = vld [vmem:[%s3 + $0x24] sm:$0xf]
    %v856 = vld [vmem:[%s3 + $0x28] sm:$0xf]
    %v857 = vld [vmem:[%s3 + $0x2c] sm:$0xf]
    %v858 = vld [vmem:[%s3 + $0x30] sm:$0xf]
    %v859 = vld [vmem:[%s3 + $0x34] sm:$0xf]
    %v860 = vld [vmem:[%s3 + $0x38] sm:$0xf]
    %v861 = vld [vmem:[%s3 + $0x3c] sm:$0xf]
    %v862 = vld [vmem:[%s3 + $0x40] sm:$0xf]
    %v863 = vld [vmem:[%s3 + $0x44] sm:$0xf]
    %v864 = vld [vmem:[%s3 + $0x48] sm:$0xf]
    %v865 = vld [vmem:[%s3 + $0x4c] sm:$0xf]
    %v866 = vld [vmem:[%s3 + $0x50] sm:$0xf]
    %v867 = vld [vmem:[%s3 + $0x54] sm:$0xf]
    %v868 = vld [vmem:[%s3 + $0x58] sm:$0xf]
    %v869 = vld [vmem:[%s3 + $0x5c] sm:$0xf]
    %v870 = vld [vmem:[%s3 + $0x60] sm:$0xf]
    %v871 = vld [vmem:[%s3 + $0x64] sm:$0xf]
    %v872 = vld [vmem:[%s3 + $0x68] sm:$0xf]
    %v873 = vld [vmem:[%s3 + $0x6c] sm:$0xf]
    %v874 = vld [vmem:[%s3 + $0x70] sm:$0xf]
    %v875 = vld [vmem:[%s3 + $0x74] sm:$0xf]
    %v876 = vld [vmem:[%s3 + $0x78] sm:$0xf]
    %v877 = vld [vmem:[%s3 + $0x7c] sm:$0xf]
    %v878 = vld [vmem:[%s4] sm:$0x1]
    %v880 = vlaneseq
    %v881 = vshrl.u32 %v880, 7
    %v882 = vsub.s32 0, %v881
    %v883 = vrot.slane %v878, %v882
    %v917 = vunpack.c.l.b16 %v846
    %v918 = vunpack.c.l.b16 %v847
    %v919 = vunpack.c.l.b16 %v848
    %v920 = vunpack.c.l.b16 %v849
    %v921 = vunpack.c.l.b16 %v850
    %v922 = vunpack.c.l.b16 %v851
    %v923 = vunpack.c.l.b16 %v852
    %v924 = vunpack.c.l.b16 %v853
    %v925 = vunpack.c.l.b16 %v854
    %v926 = vunpack.c.l.b16 %v855
    %v927 = vunpack.c.l.b16 %v856
    %v928 = vunpack.c.l.b16 %v857
    %v929 = vunpack.c.l.b16 %v858
    %v930 = vunpack.c.l.b16 %v859
    %v931 = vunpack.c.l.b16 %v860
    %v932 = vunpack.c.l.b16 %v861
    %v933 = vunpack.c.l.b16 %v862
    %v934 = vunpack.c.l.b16 %v863
    %v935 = vunpack.c.l.b16 %v864
    %v936 = vunpack.c.l.b16 %v865
    %v937 = vunpack.c.l.b16 %v866
    %v938 = vunpack.c.l.b16 %v867
    %v939 = vunpack.c.l.b16 %v868
    %v940 = vunpack.c.l.b16 %v869
    %v941 = vunpack.c.l.b16 %v870
    %v942 = vunpack.c.l.b16 %v871
    %v943 = vunpack.c.l.b16 %v872
    %v944 = vunpack.c.l.b16 %v873
    %v945 = vunpack.c.l.b16 %v874
    %v946 = vunpack.c.l.b16 %v875
    %v947 = vunpack.c.l.b16 %v876
    %v948 = vunpack.c.l.b16 %v877
    %v949 = vpack.c.b16 %v918, %v917
    %v950 = vpack.c.b16 %v920, %v919
    %v951 = vpack.c.b16 %v922, %v921
    %v952 = vpack.c.b16 %v924, %v923
    %v953 = vpack.c.b16 %v926, %v925
    %v954 = vpack.c.b16 %v928, %v927
    %v955 = vpack.c.b16 %v930, %v929
    %v956 = vpack.c.b16 %v932, %v931
    %v957 = vpack.c.b16 %v934, %v933
    %v958 = vpack.c.b16 %v936, %v935
    %v959 = vpack.c.b16 %v938, %v937
    %v960 = vpack.c.b16 %v940, %v939
    %v961 = vpack.c.b16 %v942, %v941
    %v962 = vpack.c.b16 %v944, %v943
    %v963 = vpack.c.b16 %v946, %v945
    %v964 = vpack.c.b16 %v948, %v947
    %981 = vmatprep.subr.bf16.mxu0 0
    %982 = vmatpush1.bf16.msra.mxu0 %v949
    %983 = vmatprep.subr.bf16.mxu0 0
    %984 = vmatpush1.bf16.msra.mxu0 %v950
    %985 = vmatprep.subr.bf16.mxu0 0
    %986 = vmatpush1.bf16.msra.mxu0 %v951
    %987 = vmatprep.subr.bf16.mxu0 0
    %988 = vmatpush1.bf16.msra.mxu0 %v952
    %989 = vmatprep.subr.bf16.mxu0 0
    %990 = vmatpush1.bf16.msra.mxu0 %v953
    %991 = vmatprep.subr.bf16.mxu0 0
    %992 = vmatpush1.bf16.msra.mxu0 %v954
    %993 = vmatprep.subr.bf16.mxu0 0
    %994 = vmatpush1.bf16.msra.mxu0 %v955
    %995 = vmatprep.subr.bf16.mxu0 0
    %996 = vmatpush1.bf16.msra.mxu0 %v956
    %997 = vmatprep.subr.bf16.mxu0 0
    %998 = vmatpush1.bf16.msra.mxu0 %v957
    %999 = vmatprep.subr.bf16.mxu0 0
    %1000 = vmatpush1.bf16.msra.mxu0 %v958
    %1001 = vmatprep.subr.bf16.mxu0 0
    %1002 = vmatpush1.bf16.msra.mxu0 %v959
    %1003 = vmatprep.subr.bf16.mxu0 0
    %1004 = vmatpush1.bf16.msra.mxu0 %v960
    %1005 = vmatprep.subr.bf16.mxu0 0
    %1006 = vmatpush1.bf16.msra.mxu0 %v961
    %1007 = vmatprep.subr.bf16.mxu0 0
    %1008 = vmatpush1.bf16.msra.mxu0 %v962
    %1009 = vmatprep.subr.bf16.mxu0 0
    %1010 = vmatpush1.bf16.msra.mxu0 %v963
    %1011 = vmatprep.subr.bf16.mxu0 0
    %1012 = vmatpush1.bf16.msra.mxu0 %v964
    %1013 = vmatprep.mubr.bf16.mxu0 %v845
    %1014 = vmatmul.mubr.bf16.gmra.mrb[0].mxu0 %v844
    %v1015 = vpop.f32.mrb[0].mxu0
    %v1016 = vadd.f32 %v883, %v1015
    %v1017 = vpop.f32.mrb[0].mxu0
    %v1018 = vpop.f32.mrb[0].mxu0
    %v1019 = vpop.f32.mrb[0].mxu0
    %1020 = vdwg.mxu0
    %v1021 = vmax.f32 %v1016, 0.0
    %v1022 = vpack.c.bf16 %v1021, %v1021
    %v1023 = vld [vmem:[%s5] sm:$0xf]
    %v1024 = vld [vmem:[%s5 + $0x4] sm:$0xf]
    %v1025 = vld [vmem:[%s5 + $0x8] sm:$0xf]
    %v1026 = vld [vmem:[%s5 + $0xc] sm:$0xf]
    %v1027 = vld [vmem:[%s5 + $0x10] sm:$0xf]
    %v1028 = vld [vmem:[%s5 + $0x14] sm:$0xf]
    %v1029 = vld [vmem:[%s5 + $0x18] sm:$0xf]
    %v1030 = vld [vmem:[%s5 + $0x1c] sm:$0xf]
    %v1031 = vld [vmem:[%s5 + $0x20] sm:$0xf]
    %v1032 = vld [vmem:[%s5 + $0x24] sm:$0xf]
    %v1033 = vld [vmem:[%s5 + $0x28] sm:$0xf]
    %v1034 = vld [vmem:[%s5 + $0x2c] sm:$0xf]
    %v1035 = vld [vmem:[%s5 + $0x30] sm:$0xf]
    %v1036 = vld [vmem:[%s5 + $0x34] sm:$0xf]
    %v1037 = vld [vmem:[%s5 + $0x38] sm:$0xf]
    %v1038 = vld [vmem:[%s5 + $0x3c] sm:$0xf]
    %v1039 = vld [vmem:[%s6] sm:$0x1]
    %v1041 = vlaneseq
    %v1042 = vshrl.u32 %v1041, 7
    %v1043 = vsub.s32 0, %v1042
    %v1044 = vrot.slane %v1039, %v1043
    %v1062 = vunpack.c.l.b16 %v1023
    %v1063 = vunpack.c.l.b16 %v1024
    %v1064 = vunpack.c.l.b16 %v1025
    %v1065 = vunpack.c.l.b16 %v1026
    %v1066 = vunpack.c.l.b16 %v1027
    %v1067 = vunpack.c.l.b16 %v1028
    %v1068 = vunpack.c.l.b16 %v1029
    %v1069 = vunpack.c.l.b16 %v1030
    %v1070 = vunpack.c.l.b16 %v1031
    %v1071 = vunpack.c.l.b16 %v1032
    %v1072 = vunpack.c.l.b16 %v1033
    %v1073 = vunpack.c.l.b16 %v1034
    %v1074 = vunpack.c.l.b16 %v1035
    %v1075 = vunpack.c.l.b16 %v1036
    %v1076 = vunpack.c.l.b16 %v1037
    %v1077 = vunpack.c.l.b16 %v1038
    %v1078 = vpack.c.b16 %v1063, %v1062
    %v1079 = vpack.c.b16 %v1065, %v1064
    %v1080 = vpack.c.b16 %v1067, %v1066
    %v1081 = vpack.c.b16 %v1069, %v1068
    %v1082 = vpack.c.b16 %v1071, %v1070
    %v1083 = vpack.c.b16 %v1073, %v1072
    %v1084 = vpack.c.b16 %v1075, %v1074
    %v1085 = vpack.c.b16 %v1077, %v1076
    %1094 = vmatprep.subr.bf16.mxu0 0
    %1095 = vmatpush1.bf16.msra.mxu0 %v1078
    %1096 = vmatprep.subr.bf16.mxu0 0
    %1097 = vmatpush1.bf16.msra.mxu0 %v1079
    %1098 = vmatprep.subr.bf16.mxu0 0
    %1099 = vmatpush1.bf16.msra.mxu0 %v1080
    %1100 = vmatprep.subr.bf16.mxu0 0
    %1101 = vmatpush1.bf16.msra.mxu0 %v1081
    %1102 = vmatprep.subr.bf16.mxu0 0
    %1103 = vmatpush1.bf16.msra.mxu0 %v1082
    %1104 = vmatprep.subr.bf16.mxu0 0
    %1105 = vmatpush1.bf16.msra.mxu0 %v1083
    %1106 = vmatprep.subr.bf16.mxu0 0
    %1107 = vmatpush1.bf16.msra.mxu0 %v1084
    %1108 = vmatprep.subr.bf16.mxu0 0
    %1109 = vmatpush1.bf16.msra.mxu0 %v1085
    %1110 = vmatprep.subr.bf16.mxu0 0
    %1111 = vmatpush1.bf16.msra.mxu0 0
    %1112 = vmatprep.subr.bf16.mxu0 0
    %1113 = vmatpush1.bf16.msra.mxu0 0
    %1114 = vmatprep.subr.bf16.mxu0 0
    %1115 = vmatpush1.bf16.msra.mxu0 0
    %1116 = vmatprep.subr.bf16.mxu0 0
    %1117 = vmatpush1.bf16.msra.mxu0 0
    %1118 = vmatprep.subr.bf16.mxu0 0
    %1119 = vmatpush1.bf16.msra.mxu0 0
    %1120 = vmatprep.subr.bf16.mxu0 0
    %1121 = vmatpush1.bf16.msra.mxu0 0
    %1122 = vmatprep.subr.bf16.mxu0 0
    %1123 = vmatpush1.bf16.msra.mxu0 0
    %1124 = vmatprep.subr.bf16.mxu0 0
    %1125 = vmatpush1.bf16.msra.mxu0 0
    %1126 = vmatprep.mubr.bf16.mxu0 0
    %1127 = vmatmul.mubr.bf16.gmra.mrb[0].mxu0 %v1022
    %v1128 = vpop.f32.mrb[0].mxu0
    %v1129 = vadd.f32 %v1044, %v1128
    %v1130 = vpop.f32.mrb[0].mxu0
    %v1131 = vpop.f32.mrb[0].mxu0
    %v1132 = vpop.f32.mrb[0].mxu0
    %1133 = vdwg.mxu0
    %v1134 = vmax.f32 %v1129, 0.0
    %v1135 = vpack.c.bf16 %v1134, %v1134
    %v1136 = vld [vmem:[%s7] sm:$0xf]
    %v1137 = vld [vmem:[%s7 + $0x4] sm:$0xf]
    %v1138 = vld [vmem:[%s7 + $0x8] sm:$0xf]
    %v1139 = vld [vmem:[%s7 + $0xc] sm:$0xf]
    %v1140 = vld [vmem:[%s7 + $0x10] sm:$0xf]
    %v1141 = vld [vmem:[%s7 + $0x14] sm:$0xf]
    %v1142 = vld [vmem:[%s7 + $0x18] sm:$0xf]
    %v1143 = vld [vmem:[%s7 + $0x1c] sm:$0xf]
    %v1144 = vld [vmem:[%s8] sm:$0x1]
    %v1146 = vlaneseq
    %v1147 = vshrl.u32 %v1146, 7
    %v1148 = vsub.s32 0, %v1147
    %v1149 = vrot.slane %v1144, %v1148
    %v1159 = vunpack.c.l.b16 %v1136
    %v1160 = vunpack.c.l.b16 %v1137
    %v1161 = vunpack.c.l.b16 %v1138
    %v1162 = vunpack.c.l.b16 %v1139
    %v1163 = vunpack.c.l.b16 %v1140
    %v1164 = vunpack.c.l.b16 %v1141
    %v1165 = vunpack.c.l.b16 %v1142
    %v1166 = vunpack.c.l.b16 %v1143
    %v1167 = vpack.c.b16 %v1160, %v1159
    %v1168 = vpack.c.b16 %v1162, %v1161
    %v1169 = vpack.c.b16 %v1164, %v1163
    %v1170 = vpack.c.b16 %v1166, %v1165
    %vm1175 = vcmask 523264
    %v1177 = vsel %vm1175, %v1135, 0
    %1179 = vmatprep.subr.bf16.mxu0 0
    %1180 = vmatpush1.bf16.msra.mxu0 %v1167
    %1181 = vmatprep.subr.bf16.mxu0 0
    %1182 = vmatpush1.bf16.msra.mxu0 %v1168
    %1183 = vmatprep.subr.bf16.mxu0 0
    %1184 = vmatpush1.bf16.msra.mxu0 %v1169
    %1185 = vmatprep.subr.bf16.mxu0 0
    %1186 = vmatpush1.bf16.msra.mxu0 %v1170
    %1187 = vmatprep.subr.bf16.mxu0 0
    %1188 = vmatpush1.bf16.msra.mxu0 0
    %1189 = vmatprep.subr.bf16.mxu0 0
    %1190 = vmatpush1.bf16.msra.mxu0 0
    %1191 = vmatprep.subr.bf16.mxu0 0
    %1192 = vmatpush1.bf16.msra.mxu0 0
    %1193 = vmatprep.subr.bf16.mxu0 0
    %1194 = vmatpush1.bf16.msra.mxu0 0
    %1195 = vmatprep.subr.bf16.mxu0 0
    %1196 = vmatpush1.bf16.msra.mxu0 0
    %1197 = vmatprep.subr.bf16.mxu0 0
    %1198 = vmatpush1.bf16.msra.mxu0 0
    %1199 = vmatprep.subr.bf16.mxu0 0
    %1200 = vmatpush1.bf16.msra.mxu0 0
    %1201 = vmatprep.subr.bf16.mxu0 0
    %1202 = vmatpush1.bf16.msra.mxu0 0
    %1203 = vmatprep.subr.bf16.mxu0 0
    %1204 = vmatpush1.bf16.msra.mxu0 0
    %1205 = vmatprep.subr.bf16.mxu0 0
    %1206 = vmatpush1.bf16.msra.mxu0 0
    %1207 = vmatprep.subr.bf16.mxu0 0
    %1208 = vmatpush1.bf16.msra.mxu0 0
    %1209 = vmatprep.subr.bf16.mxu0 0
    %1210 = vmatpush1.bf16.msra.mxu0 0
    %1211 = vmatprep.mubr.bf16.mxu0 0
    %1212 = vmatmul.mubr.bf16.gmra.mrb[0].mxu0 %v1177
    %v1213 = vpop.f32.mrb[0].mxu0
    %v1214 = vadd.f32 %v1149, %v1213
    %v1215 = vpop.f32.mrb[0].mxu0
    %v1216 = vpop.f32.mrb[0].mxu0
    %v1217 = vpop.f32.mrb[0].mxu0
    %1218 = vdwg.mxu0
    %vm1219 = vcmask 80896
    %v1220 = vsel %vm1219, %v1214, -inf
    %1221 = vmax.xlane.f32.xlu0 %v1220
    %v1222 = vpop.xlane.xlu0 %1221
    %v1223 = vsub.f32 %v1214, %v1222
    %v1224 = vmul.f32 %v1223, 1.442695
    %v1225 = vpow.pop %v1224
    %v1226 = vsel %vm1219, %v1225, 0.0
    %1227 = vadd.xlane.f32.xlu0 %v1226
    %v1228 = vpop.xlane.xlu0 %1227
    %v1229 = vlog2.pop %v1228
    %v1230 = vmul.f32 %v1229, 0.6931472
    %v1231 = vsub.f32 %v1223, %v1230
    %1232 = vst.msk [vmem:[#allocation7] sm:$0xff] %vm1219, %v1231
    // Predicated region
    $region46: #{tpu_custom_call.1} parent=1 // pred_check
      _
    $region47: #{tpu_custom_call.1} parent=1 // pred_check_branch
      %1234 = sbr.rel (0) target = $region49
    $region48: #{tpu_custom_call.1} parent=1 // pred_region
      %s1236 = ssub.s32 128, 128
      %1237 = vsyncadd [#allocation4], %s1236
      %s1239 = sshll.u32 [#allocation7], 4
      %s1240 = int_to_ptr.vmem [resolvable:$true] %s1239
      %1242 = dma.vmem_to_hbm [thread:$0]  %s1240, 128, %s9, [#allocation4]
    $region49: #{tpu_custom_call.1} parent=1 // pred_fallthru
      _
    // Predicated region
    $region50: #{tpu_custom_call.1} parent=1 // pred_check
      _
    $region51: #{tpu_custom_call.1} parent=1 // pred_check_branch
      %1244 = sbr.rel (0) target = $region53
    $region52: #{tpu_custom_call.1} parent=1 // pred_region
      %1245 = dma.done [#allocation4], 128
    $region53: #{tpu_custom_call.1} parent=1 // pred_fallthru
      _
    %1246 = vsyncpa [#allocation3], 1
    %1247 = vsyncpa [#allocation6], 1
    %1248 = vsyncpa [#allocation4], 1

// kernel: tpu_custom_call.1
$region0: #{tpu_custom_call.1}
  #allocation0 [shape = 'u32[]', space=smem, size = 0x4, offset = 0x4, fixed_abs, tag = 'smem constant byte address 0x4 - core index']
  #allocation1 [shape = 'u32[144,128]{1,0:T(1,128)}', space=vmem, size = 0x12000, scoped, tag = 'internal scratch']
  %s0 = inlined_call_operand.hbm [shape: f32[8,784], index: 0, kind: input, shape index: {}]
  %s1 = inlined_call_operand.hbm [shape: bf16[784,256], index: 1, kind: input, shape index: {}]
  %s2 = inlined_call_operand.vmem [shape: f32[1,256], index: 2, kind: input, shape index: {}]
  %s3 = inlined_call_operand.vmem [shape: bf16[256,128], index: 3, kind: input, shape index: {}]
  %s4 = inlined_call_operand.vmem [shape: f32[1,128], index: 4, kind: input, shape index: {}]
  %s5 = inlined_call_operand.vmem [shape: bf16[128,64], index: 5, kind: input, shape index: {}]
  %s6 = inlined_call_operand.vmem [shape: f32[1,64], index: 6, kind: input, shape index: {}]
  %s7 = inlined_call_operand.vmem [shape: bf16[64,10], index: 7, kind: input, shape index: {}]
  %s8 = inlined_call_operand.vmem [shape: f32[1,10], index: 8, kind: input, shape index: {}]
  %s9 = inlined_call_operand.hbm [shape: f32[8,10], index: 9, kind: output, shape index: {}]
  %s10 = sld [smem:[#allocation0]]
  $region54: #{tpu_custom_call.1} parent=0
    _
  %s12 = ssub.s32 1, %s10
  %s13 = scalar_select 0, %s12, %s10
  $region1: #{tpu_custom_call.1} parent=0
    #allocation2 [shape = 'u8[28672]{0}', space=vmem, size = 0x7000, scoped, tag = 'input window, operand 0, single buffered']
    #allocation3 [shape = 's32[1]{0}', space=sflag, size = 0x4, scoped, tag = 'scoped memory for tpu_custom_call.1']
    #allocation4 [shape = 's32[1]{0}', space=sflag, size = 0x4, scoped, tag = 'scoped memory for tpu_custom_call.1']
    #allocation5 [shape = 'u8[401408]{0}', space=vmem, size = 0x62000, scoped, tag = 'input window, operand 1, single buffered']
    #allocation6 [shape = 's32[1]{0}', space=sflag, size = 0x4, scoped, tag = 'scoped memory for tpu_custom_call.1']
    #allocation7 [shape = 'u8[4096]{0}', space=vmem, size = 0x1000, scoped, tag = 'output window, operand 0, single buffered']
    %14 = vsyncpa [#allocation3], 0
    %15 = vsyncpa [#allocation6], 0
    %16 = vsyncpa [#allocation4], 0
    // Predicated region
    $region2: #{tpu_custom_call.1} parent=1 // pred_check
      _
    $region3: #{tpu_custom_call.1} parent=1 // pred_check_branch
      %18 = sbr.rel (0) target = $region5
    $region4: #{tpu_custom_call.1} parent=1 // pred_region
      %s20 = ssub.s32 896, 896
      %21 = vsyncadd [#allocation3], %s20
      %s23 = sshll.u32 [#allocation2], 4
      %s24 = int_to_ptr.vmem [resolvable:$true] %s23
      %26 = dma.hbm_to_vmem [thread:$0]  %s0, 896, %s24, [#allocation3]
    $region5: #{tpu_custom_call.1} parent=1 // pred_fallthru
      _
    // Predicated region
    $region6: #{tpu_custom_call.1} parent=1 // pred_check
      _
    $region7: #{tpu_custom_call.1} parent=1 // pred_check_branch
      %28 = sbr.rel (0) target = $region9
    $region8: #{tpu_custom_call.1} parent=1 // pred_region
      %s30 = ssub.s32 12544, 12544
      %31 = vsyncadd [#allocation6], %s30
      %s32 = sshll.u32 [#allocation5], 4
      %s33 = int_to_ptr.vmem [resolvable:$true] %s32
      %38 = dma.hbm_to_vmem [thread:$0]  %s1, 12544, %s33, [#allocation6], 128, 128, 8
    $region9: #{tpu_custom_call.1} parent=1 // pred_fallthru
      _
    // Predicated region
    $region10: #{tpu_custom_call.1} parent=1 // pred_check
      _
    $region11: #{tpu_custom_call.1} parent=1 // pred_check_branch
      %40 = sbr.rel (0) target = $region13
    $region12: #{tpu_custom_call.1} parent=1 // pred_region
      _
    $region13: #{tpu_custom_call.1} parent=1 // pred_fallthru
      _
    // Predicated region
    $region14: #{tpu_custom_call.1} parent=1 // pred_check
      _
    $region15: #{tpu_custom_call.1} parent=1 // pred_check_branch
      %42 = sbr.rel (0) target = $region17
    $region16: #{tpu_custom_call.1} parent=1 // pred_region
      _
    $region17: #{tpu_custom_call.1} parent=1 // pred_fallthru
      _
    // Predicated region
    $region18: #{tpu_custom_call.1} parent=1 // pred_check
      _
    $region19: #{tpu_custom_call.1} parent=1 // pred_check_branch
      %44 = sbr.rel (0) target = $region21
    $region20: #{tpu_custom_call.1} parent=1 // pred_region
      _
    $region21: #{tpu_custom_call.1} parent=1 // pred_fallthru
      _
    // Predicated region
    $region22: #{tpu_custom_call.1} parent=1 // pred_check
      _
    $region23: #{tpu_custom_call.1} parent=1 // pred_check_branch
      %46 = sbr.rel (0) target = $region25
    $region24: #{tpu_custom_call.1} parent=1 // pred_region
      _
    $region25: #{tpu_custom_call.1} parent=1 // pred_fallthru
      _
    // Predicated region
    $region26: #{tpu_custom_call.1} parent=1 // pred_check
      _
    $region27: #{tpu_custom_call.1} parent=1 // pred_check_branch
      %48 = sbr.rel (0) target = $region29
    $region28: #{tpu_custom_call.1} parent=1 // pred_region
      _
    $region29: #{tpu_custom_call.1} parent=1 // pred_fallthru
      _
    // Predicated region
    $region30: #{tpu_custom_call.1} parent=1 // pred_check
      _
    $region31: #{tpu_custom_call.1} parent=1 // pred_check_branch
      %50 = sbr.rel (0) target = $region33
    $region32: #{tpu_custom_call.1} parent=1 // pred_region
      _
    $region33: #{tpu_custom_call.1} parent=1 // pred_fallthru
      _
    // Predicated region
    $region34: #{tpu_custom_call.1} parent=1 // pred_check
      _
    $region35: #{tpu_custom_call.1} parent=1 // pred_check_branch
      %52 = sbr.rel (0) target = $region37
    $region36: #{tpu_custom_call.1} parent=1 // pred_region
      _
    $region37: #{tpu_custom_call.1} parent=1 // pred_fallthru
      _
    // Predicated region
    $region38: #{tpu_custom_call.1} parent=1 // pred_check
      _
    $region39: #{tpu_custom_call.1} parent=1 // pred_check_branch
      %54 = sbr.rel (0) target = $region41
    $region40: #{tpu_custom_call.1} parent=1 // pred_region
      %55 = dma.done [#allocation3], 896
    $region41: #{tpu_custom_call.1} parent=1 // pred_fallthru
      _
    // Predicated region
    $region42: #{tpu_custom_call.1} parent=1 // pred_check
      _
    $region43: #{tpu_custom_call.1} parent=1 // pred_check_branch
      %57 = sbr.rel (0) target = $region45
    $region44: #{tpu_custom_call.1} parent=1 // pred_region
      %58 = dma.done [#allocation6], 12544
    $region45: #{tpu_custom_call.1} parent=1 // pred_fallthru
      _
    %v60 = vld [vmem:[#allocation2] sm:$0xff]
    %v61 = vld [vmem:[#allocation2 + $0x8] sm:$0xff]
    %v62 = vld [vmem:[#allocation2 + $0x10] sm:$0xff]
    %v63 = vld [vmem:[#allocation2 + $0x18] sm:$0xff]
    %v64 = vld [vmem:[#allocation2 + $0x20] sm:$0xff]
    %v65 = vld [vmem:[#allocation2 + $0x28] sm:$0xff]
    %v66 = vld [vmem:[#allocation2 + $0x30] sm:$0xff]
    %v67 = vpack.c.bf16 %v60, %v60
    %v68 = vpack.c.bf16 %v61, %v61
    %v69 = vpack.c.bf16 %v62, %v62
    %v70 = vpack.c.bf16 %v63, %v63
    %v71 = vpack.c.bf16 %v64, %v64
    %v72 = vpack.c.bf16 %v65, %v65
    %v73 = vpack.c.bf16 %v66, %v66
    %v74 = vld [vmem:[#allocation5] sm:$0xff]
    %v75 = vld [vmem:[#allocation5 + $0x8] sm:$0xff]
    %v76 = vld [vmem:[#allocation5 + $0x10] sm:$0xff]
    %v77 = vld [vmem:[#allocation5 + $0x18] sm:$0xff]
    %v78 = vld [vmem:[#allocation5 + $0x20] sm:$0xff]
    %v79 = vld [vmem:[#allocation5 + $0x28] sm:$0xff]
    %v80 = vld [vmem:[#allocation5 + $0x30] sm:$0xff]
    %v81 = vld [vmem:[#allocation5 + $0x38] sm:$0xff]
    %v82 = vld [vmem:[#allocation5 + $0x40] sm:$0xff]
    %v83 = vld [vmem:[#allocation5 + $0x48] sm:$0xff]
    %v84 = vld [vmem:[#allocation5 + $0x50] sm:$0xff]
    %v85 = vld [vmem:[#allocation5 + $0x58] sm:$0xff]
    %v86 = vld [vmem:[#allocation5 + $0x60] sm:$0xff]
    %v87 = vld [vmem:[#allocation5 + $0x68] sm:$0xff]
    %v88 = vld [vmem:[#allocation5 + $0x70] sm:$0xff]
    %v89 = vld [vmem:[#allocation5 + $0x78] sm:$0xff]
    %v90 = vld [vmem:[#allocation5 + $0x80] sm:$0xff]
    %v91 = vld [vmem:[#allocation5 + $0x88] sm:$0xff]
    %v92 = vld [vmem:[#allocation5 + $0x90] sm:$0xff]
    %v93 = vld [vmem:[#allocation5 + $0x98] sm:$0xff]
    %v94 = vld [vmem:[#allocation5 + $0xa0] sm:$0xff]
    %v95 = vld [vmem:[#allocation5 + $0xa8] sm:$0xff]
    %v96 = vld [vmem:[#allocation5 + $0xb0] sm:$0xff]
    %v97 = vld [vmem:[#allocation5 + $0xb8] sm:$0xff]
    %v98 = vld [vmem:[#allocation5 + $0xc0] sm:$0xff]
    %v99 = vld [vmem:[#allocation5 + $0xc8] sm:$0xff]
    %v100 = vld [vmem:[#allocation5 + $0xd0] sm:$0xff]
    %v101 = vld [vmem:[#allocation5 + $0xd8] sm:$0xff]
    %v102 = vld [vmem:[#allocation5 + $0xe0] sm:$0xff]
    %v103 = vld [vmem:[#allocation5 + $0xe8] sm:$0xff]
    %v104 = vld [vmem:[#allocation5 + $0xf0] sm:$0xff]
    %v105 = vld [vmem:[#allocation5 + $0xf8] sm:$0xff]
    %v106 = vld [vmem:[#allocation5 + $0x100] sm:$0xff]
    %v107 = vld [vmem:[#allocation5 + $0x108] sm:$0xff]
    %v108 = vld [vmem:[#allocation5 + $0x110] sm:$0xff]
    %v109 = vld [vmem:[#allocation5 + $0x118] sm:$0xff]
    %v110 = vld [vmem:[#allocation5 + $0x120] sm:$0xff]
    %v111 = vld [vmem:[#allocation5 + $0x128] sm:$0xff]
    %v112 = vld [vmem:[#allocation5 + $0x130] sm:$0xff]
    %v113 = vld [vmem:[#allocation5 + $0x138] sm:$0xff]
    %v114 = vld [vmem:[#allocation5 + $0x140] sm:$0xff]
    %v115 = vld [vmem:[#allocation5 + $0x148] sm:$0xff]
    %v116 = vld [vmem:[#allocation5 + $0x150] sm:$0xff]
    %v117 = vld [vmem:[#allocation5 + $0x158] sm:$0xff]
    %v118 = vld [vmem:[#allocation5 + $0x160] sm:$0xff]
    %v119 = vld [vmem:[#allocation5 + $0x168] sm:$0xff]
    %v120 = vld [vmem:[#allocation5 + $0x170] sm:$0xff]
    %v121 = vld [vmem:[#allocation5 + $0x178] sm:$0xff]
    %v122 = vld [vmem:[#allocation5 + $0x180] sm:$0xff]
    %v123 = vld [vmem:[#allocation5 + $0x188] sm:$0xff]
    %v124 = vld [vmem:[#allocation5 + $0x190] sm:$0xff]
    %v125 = vld [vmem:[#allocation5 + $0x198] sm:$0xff]
    %v126 = vld [vmem:[#allocation5 + $0x1a0] sm:$0xff]
    %v127 = vld [vmem:[#allocation5 + $0x1a8] sm:$0xff]
    %v128 = vld [vmem:[#allocation5 + $0x1b0] sm:$0xff]
    %v129 = vld [vmem:[#allocation5 + $0x1b8] sm:$0xff]
    %v130 = vld [vmem:[#allocation5 + $0x1c0] sm:$0xff]
    %v131 = vld [vmem:[#allocation5 + $0x1c8] sm:$0xff]
    %v132 = vld [vmem:[#allocation5 + $0x1d0] sm:$0xff]
    %v133 = vld [vmem:[#allocation5 + $0x1d8] sm:$0xff]
    %v134 = vld [vmem:[#allocation5 + $0x1e0] sm:$0xff]
    %v135 = vld [vmem:[#allocation5 + $0x1e8] sm:$0xff]
    %v136 = vld [vmem:[#allocation5 + $0x1f0] sm:$0xff]
    %v137 = vld [vmem:[#allocation5 + $0x1f8] sm:$0xff]
    %v138 = vld [vmem:[#allocation5 + $0x200] sm:$0xff]
    %v139 = vld [vmem:[#allocation5 + $0x208] sm:$0xff]
    %v140 = vld [vmem:[#allocation5 + $0x210] sm:$0xff]
    %v141 = vld [vmem:[#allocation5 + $0x218] sm:$0xff]
    %v142 = vld [vmem:[#allocation5 + $0x220] sm:$0xff]
    %v143 = vld [vmem:[#allocation5 + $0x228] sm:$0xff]
    %v144 = vld [vmem:[#allocation5 + $0x230] sm:$0xff]
    %v145 = vld [vmem:[#allocation5 + $0x238] sm:$0xff]
    %v146 = vld [vmem:[#allocation5 + $0x240] sm:$0xff]
    %v147 = vld [vmem:[#allocation5 + $0x248] sm:$0xff]
    %v148 = vld [vmem:[#allocation5 + $0x250] sm:$0xff]
    %v149 = vld [vmem:[#allocation5 + $0x258] sm:$0xff]
    %v150 = vld [vmem:[#allocation5 + $0x260] sm:$0xff]
    %v151 = vld [vmem:[#allocation5 + $0x268] sm:$0xff]
    %v152 = vld [vmem:[#allocation5 + $0x270] sm:$0xff]
    %v153 = vld [vmem:[#allocation5 + $0x278] sm:$0xff]
    %v154 = vld [vmem:[#allocation5 + $0x280] sm:$0xff]
    %v155 = vld [vmem:[#allocation5 + $0x288] sm:$0xff]
    %v156 = vld [vmem:[#allocation5 + $0x290] sm:$0xff]
    %v157 = vld [vmem:[#allocation5 + $0x298] sm:$0xff]
    %v158 = vld [vmem:[#allocation5 + $0x2a0] sm:$0xff]
    %v159 = vld [vmem:[#allocation5 + $0x2a8] sm:$0xff]
    %v160 = vld [vmem:[#allocation5 + $0x2b0] sm:$0xff]
    %v161 = vld [vmem:[#allocation5 + $0x2b8] sm:$0xff]
    %v162 = vld [vmem:[#allocation5 + $0x2c0] sm:$0xff]
    %v163 = vld [vmem:[#allocation5 + $0x2c8] sm:$0xff]
    %v164 = vld [vmem:[#allocation5 + $0x2d0] sm:$0xff]
    %v165 = vld [vmem:[#allocation5 + $0x2d8] sm:$0xff]
    %v166 = vld [vmem:[#allocation5 + $0x2e0] sm:$0xff]
    %v167 = vld [vmem:[#allocation5 + $0x2e8] sm:$0xff]
    %v168 = vld [vmem:[#allocation5 + $0x2f0] sm:$0xff]
    %v169 = vld [vmem:[#allocation5 + $0x2f8] sm:$0xff]
    %v170 = vld [vmem:[#allocation5 + $0x300] sm:$0xff]
    %v171 = vld [vmem:[#allocation5 + $0x308] sm:$0xff]
    %v172 = vld [vmem:[%s2] sm:$0x3]
    %v174 = vlaneseq
    %v175 = vshrl.u32 %v174, 7
    %v176 = vsub.s32 0, %v175
    %v177 = vrot.slane %v172, %v176
    %v178 = vlaneseq
    %v179 = vshrl.u32 %v178, 7
    %v180 = vsub.s32 1, %v179
    %v181 = vrot.slane %v172, %v180
    %v282 = vunpack.c.l.b16 %v74
    %v283 = vunpack.c.h.b16 %v74
    %v284 = vunpack.c.l.b16 %v75
    %v285 = vunpack.c.h.b16 %v75
    %v286 = vunpack.c.l.b16 %v76
    %v287 = vunpack.c.h.b16 %v76
    %v288 = vunpack.c.l.b16 %v77
    %v289 = vunpack.c.h.b16 %v77
    %v290 = vunpack.c.l.b16 %v78
    %v291 = vunpack.c.h.b16 %v78
    %v292 = vunpack.c.l.b16 %v79
    %v293 = vunpack.c.h.b16 %v79
    %v294 = vunpack.c.l.b16 %v80
    %v295 = vunpack.c.h.b16 %v80
    %v296 = vunpack.c.l.b16 %v81
    %v297 = vunpack.c.h.b16 %v81
    %v298 = vunpack.c.l.b16 %v82
    %v299 = vunpack.c.h.b16 %v82
    %v300 = vunpack.c.l.b16 %v83
    %v301 = vunpack.c.h.b16 %v83
    %v302 = vunpack.c.l.b16 %v84
    %v303 = vunpack.c.h.b16 %v84
    %v304 = vunpack.c.l.b16 %v85
    %v305 = vunpack.c.h.b16 %v85
    %v306 = vunpack.c.l.b16 %v86
    %v307 = vunpack.c.h.b16 %v86
    %v308 = vunpack.c.l.b16 %v87
    %v309 = vunpack.c.h.b16 %v87
    %v310 = vunpack.c.l.b16 %v88
    %v311 = vunpack.c.h.b16 %v88
    %v312 = vunpack.c.l.b16 %v89
    %v313 = vunpack.c.h.b16 %v89
    %v314 = vunpack.c.l.b16 %v90
    %v315 = vunpack.c.h.b16 %v90
    %v316 = vunpack.c.l.b16 %v91
    %v317 = vunpack.c.h.b16 %v91
    %v318 = vunpack.c.l.b16 %v92
    %v319 = vunpack.c.h.b16 %v92
    %v320 = vunpack.c.l.b16 %v93
    %v321 = vunpack.c.h.b16 %v93
    %v322 = vunpack.c.l.b16 %v94
    %v323 = vunpack.c.h.b16 %v94
    %v324 = vunpack.c.l.b16 %v95
    %v325 = vunpack.c.h.b16 %v95
    %v326 = vunpack.c.l.b16 %v96
    %v327 = vunpack.c.h.b16 %v96
    %v328 = vunpack.c.l.b16 %v97
    %v329 = vunpack.c.h.b16 %v97
    %v330 = vunpack.c.l.b16 %v98
    %v331 = vunpack.c.h.b16 %v98
    %v332 = vunpack.c.l.b16 %v99
    %v333 = vunpack.c.h.b16 %v99
    %v334 = vunpack.c.l.b16 %v100
    %v335 = vunpack.c.h.b16 %v100
    %v336 = vunpack.c.l.b16 %v101
    %v337 = vunpack.c.h.b16 %v101
    %v338 = vunpack.c.l.b16 %v102
    %v339 = vunpack.c.h.b16 %v102
    %v340 = vunpack.c.l.b16 %v103
    %v341 = vunpack.c.h.b16 %v103
    %v342 = vunpack.c.l.b16 %v104
    %v343 = vunpack.c.h.b16 %v104
    %v344 = vunpack.c.l.b16 %v105
    %v345 = vunpack.c.h.b16 %v105
    %v346 = vunpack.c.l.b16 %v106
    %v347 = vunpack.c.h.b16 %v106
    %v348 = vunpack.c.l.b16 %v107
    %v349 = vunpack.c.h.b16 %v107
    %v350 = vunpack.c.l.b16 %v108
    %v351 = vunpack.c.h.b16 %v108
    %v352 = vunpack.c.l.b16 %v109
    %v353 = vunpack.c.h.b16 %v109
    %v354 = vunpack.c.l.b16 %v110
    %v355 = vunpack.c.h.b16 %v110
    %v356 = vunpack.c.l.b16 %v111
    %v357 = vunpack.c.h.b16 %v111
    %v358 = vunpack.c.l.b16 %v112
    %v359 = vunpack.c.h.b16 %v112
    %v360 = vunpack.c.l.b16 %v113
    %v361 = vunpack.c.h.b16 %v113
    %v362 = vunpack.c.l.b16 %v114
    %v363 = vunpack.c.h.b16 %v114
    %v364 = vunpack.c.l.b16 %v115
    %v365 = vunpack.c.h.b16 %v115
    %v366 = vunpack.c.l.b16 %v116
    %v367 = vunpack.c.h.b16 %v116
    %v368 = vunpack.c.l.b16 %v117
    %v369 = vunpack.c.h.b16 %v117
    %v370 = vunpack.c.l.b16 %v118
    %v371 = vunpack.c.h.b16 %v118
    %v372 = vunpack.c.l.b16 %v119
    %v373 = vunpack.c.h.b16 %v119
    %v374 = vunpack.c.l.b16 %v120
    %v375 = vunpack.c.h.b16 %v120
    %v376 = vunpack.c.l.b16 %v121
    %v377 = vunpack.c.h.b16 %v121
    %v378 = vunpack.c.l.b16 %v122
    %v379 = vunpack.c.h.b16 %v122
    %v380 = vunpack.c.l.b16 %v123
    %v381 = vunpack.c.h.b16 %v123
    %v382 = vunpack.c.l.b16 %v124
    %v383 = vunpack.c.h.b16 %v124
    %v384 = vunpack.c.l.b16 %v125
    %v385 = vunpack.c.h.b16 %v125
    %v386 = vunpack.c.l.b16 %v126
    %v387 = vunpack.c.h.b16 %v126
    %v388 = vunpack.c.l.b16 %v127
    %v389 = vunpack.c.h.b16 %v127
    %v390 = vunpack.c.l.b16 %v128
    %v391 = vunpack.c.h.b16 %v128
    %v392 = vunpack.c.l.b16 %v129
    %v393 = vunpack.c.h.b16 %v129
    %v394 = vunpack.c.l.b16 %v130
    %v395 = vunpack.c.h.b16 %v130
    %v396 = vunpack.c.l.b16 %v131
    %v397 = vunpack.c.h.b16 %v131
    %v398 = vunpack.c.l.b16 %v132
    %v399 = vunpack.c.h.b16 %v132
    %v400 = vunpack.c.l.b16 %v133
    %v401 = vunpack.c.h.b16 %v133
    %v402 = vunpack.c.l.b16 %v134
    %v403 = vunpack.c.h.b16 %v134
    %v404 = vunpack.c.l.b16 %v135
    %v405 = vunpack.c.h.b16 %v135
    %v406 = vunpack.c.l.b16 %v136
    %v407 = vunpack.c.h.b16 %v136
    %v408 = vunpack.c.l.b16 %v137
    %v409 = vunpack.c.h.b16 %v137
    %v410 = vunpack.c.l.b16 %v138
    %v411 = vunpack.c.h.b16 %v138
    %v412 = vunpack.c.l.b16 %v139
    %v413 = vunpack.c.h.b16 %v139
    %v414 = vunpack.c.l.b16 %v140
    %v415 = vunpack.c.h.b16 %v140
    %v416 = vunpack.c.l.b16 %v141
    %v417 = vunpack.c.h.b16 %v141
    %v418 = vunpack.c.l.b16 %v142
    %v419 = vunpack.c.h.b16 %v142
    %v420 = vunpack.c.l.b16 %v143
    %v421 = vunpack.c.h.b16 %v143
    %v422 = vunpack.c.l.b16 %v144
    %v423 = vunpack.c.h.b16 %v144
    %v424 = vunpack.c.l.b16 %v145
    %v425 = vunpack.c.h.b16 %v145
    %v426 = vunpack.c.l.b16 %v146
    %v427 = vunpack.c.h.b16 %v146
    %v428 = vunpack.c.l.b16 %v147
    %v429 = vunpack.c.h.b16 %v147
    %v430 = vunpack.c.l.b16 %v148
    %v431 = vunpack.c.h.b16 %v148
    %v432 = vunpack.c.l.b16 %v149
    %v433 = vunpack.c.h.b16 %v149
    %v434 = vunpack.c.l.b16 %v150
    %v435 = vunpack.c.h.b16 %v150
    %v436 = vunpack.c.l.b16 %v151
    %v437 = vunpack.c.h.b16 %v151
    %v438 = vunpack.c.l.b16 %v152
    %v439 = vunpack.c.h.b16 %v152
    %v440 = vunpack.c.l.b16 %v153
    %v441 = vunpack.c.h.b16 %v153
    %v442 = vunpack.c.l.b16 %v154
    %v443 = vunpack.c.h.b16 %v154
    %v444 = vunpack.c.l.b16 %v155
    %v445 = vunpack.c.h.b16 %v155
    %v446 = vunpack.c.l.b16 %v156
    %v447 = vunpack.c.h.b16 %v156
    %v448 = vunpack.c.l.b16 %v157
    %v449 = vunpack.c.h.b16 %v157
    %v450 = vunpack.c.l.b16 %v158
    %v451 = vunpack.c.h.b16 %v158
    %v452 = vunpack.c.l.b16 %v159
    %v453 = vunpack.c.h.b16 %v159
    %v454 = vunpack.c.l.b16 %v160
    %v455 = vunpack.c.h.b16 %v160
    %v456 = vunpack.c.l.b16 %v161
    %v457 = vunpack.c.h.b16 %v161
    %v458 = vunpack.c.l.b16 %v162
    %v459 = vunpack.c.h.b16 %v162
    %v460 = vunpack.c.l.b16 %v163
    %v461 = vunpack.c.h.b16 %v163
    %v462 = vunpack.c.l.b16 %v164
    %v463 = vunpack.c.h.b16 %v164
    %v464 = vunpack.c.l.b16 %v165
    %v465 = vunpack.c.h.b16 %v165
    %v466 = vunpack.c.l.b16 %v166
    %v467 = vunpack.c.h.b16 %v166
    %v468 = vunpack.c.l.b16 %v167
    %v469 = vunpack.c.h.b16 %v167
    %v470 = vunpack.c.l.b16 %v168
    %v471 = vunpack.c.h.b16 %v168
    %v472 = vunpack.c.l.b16 %v169
    %v473 = vunpack.c.h.b16 %v169
    %v474 = vunpack.c.l.b16 %v170
    %v475 = vunpack.c.h.b16 %v170
    %v476 = vunpack.c.l.b16 %v171
    %v477 = vunpack.c.h.b16 %v171
    %v478 = vpack.c.b16 %v284, %v282
    %v479 = vpack.c.b16 %v285, %v283
    %v480 = vpack.c.b16 %v288, %v286
    %v481 = vpack.c.b16 %v289, %v287
    %v482 = vpack.c.b16 %v292, %v290
    %v483 = vpack.c.b16 %v293, %v291
    %v484 = vpack.c.b16 %v296, %v294
    %v485 = vpack.c.b16 %v297, %v295
    %v486 = vpack.c.b16 %v300, %v298
    %v487 = vpack.c.b16 %v301, %v299
    %v488 = vpack.c.b16 %v304, %v302
    %v489 = vpack.c.b16 %v305, %v303
    %v490 = vpack.c.b16 %v308, %v306
    %v491 = vpack.c.b16 %v309, %v307
    %v492 = vpack.c.b16 %v312, %v310
    %v493 = vpack.c.b16 %v313, %v311
    %v494 = vpack.c.b16 %v316, %v314
    %v495 = vpack.c.b16 %v317, %v315
    %v496 = vpack.c.b16 %v320, %v318
    %v497 = vpack.c.b16 %v321, %v319
    %v498 = vpack.c.b16 %v324, %v322
    %v499 = vpack.c.b16 %v325, %v323
    %v500 = vpack.c.b16 %v328, %v326
    %v501 = vpack.c.b16 %v329, %v327
    %v502 = vpack.c.b16 %v332, %v330
    %v503 = vpack.c.b16 %v333, %v331
    %v504 = vpack.c.b16 %v336, %v334
    %v505 = vpack.c.b16 %v337, %v335
    %v506 = vpack.c.b16 %v340, %v338
    %v507 = vpack.c.b16 %v341, %v339
    %v508 = vpack.c.b16 %v344, %v342
    %v509 = vpack.c.b16 %v345, %v343
    %v510 = vpack.c.b16 %v348, %v346
    %v511 = vpack.c.b16 %v349, %v347
    %v512 = vpack.c.b16 %v352, %v350
    %v513 = vpack.c.b16 %v353, %v351
    %v514 = vpack.c.b16 %v356, %v354
    %v515 = vpack.c.b16 %v357, %v355
    %v516 = vpack.c.b16 %v360, %v358
    %v517 = vpack.c.b16 %v361, %v359
    %v518 = vpack.c.b16 %v364, %v362
    %v519 = vpack.c.b16 %v365, %v363
    %v520 = vpack.c.b16 %v368, %v366
    %v521 = vpack.c.b16 %v369, %v367
    %v522 = vpack.c.b16 %v372, %v370
    %v523 = vpack.c.b16 %v373, %v371
    %v524 = vpack.c.b16 %v376, %v374
    %v525 = vpack.c.b16 %v377, %v375
    %v526 = vpack.c.b16 %v380, %v378
    %v527 = vpack.c.b16 %v381, %v379
    %v528 = vpack.c.b16 %v384, %v382
    %v529 = vpack.c.b16 %v385, %v383
    %v530 = vpack.c.b16 %v388, %v386
    %v531 = vpack.c.b16 %v389, %v387
    %v532 = vpack.c.b16 %v392, %v390
    %v533 = vpack.c.b16 %v393, %v391
    %v534 = vpack.c.b16 %v396, %v394
    %v535 = vpack.c.b16 %v397, %v395
    %v536 = vpack.c.b16 %v400, %v398
    %v537 = vpack.c.b16 %v401, %v399
    %v538 = vpack.c.b16 %v404, %v402
    %v539 = vpack.c.b16 %v405, %v403
    %v540 = vpack.c.b16 %v408, %v406
    %v541 = vpack.c.b16 %v409, %v407
    %v542 = vpack.c.b16 %v412, %v410
    %v543 = vpack.c.b16 %v413, %v411
    %v544 = vpack.c.b16 %v416, %v414
    %v545 = vpack.c.b16 %v417, %v415
    %v546 = vpack.c.b16 %v420, %v418
    %v547 = vpack.c.b16 %v421, %v419
    %v548 = vpack.c.b16 %v424, %v422
    %v549 = vpack.c.b16 %v425, %v423
    %v550 = vpack.c.b16 %v428, %v426
    %v551 = vpack.c.b16 %v429, %v427
    %v552 = vpack.c.b16 %v432, %v430
    %v553 = vpack.c.b16 %v433, %v431
    %v554 = vpack.c.b16 %v436, %v434
    %v555 = vpack.c.b16 %v437, %v435
    %v556 = vpack.c.b16 %v440, %v438
    %v557 = vpack.c.b16 %v441, %v439
    %v558 = vpack.c.b16 %v444, %v442
    %v559 = vpack.c.b16 %v445, %v443
    %v560 = vpack.c.b16 %v448, %v446
    %v561 = vpack.c.b16 %v449, %v447
    %v562 = vpack.c.b16 %v452, %v450
    %v563 = vpack.c.b16 %v453, %v451
    %v564 = vpack.c.b16 %v456, %v454
    %v565 = vpack.c.b16 %v457, %v455
    %v566 = vpack.c.b16 %v460, %v458
    %v567 = vpack.c.b16 %v461, %v459
    %v568 = vpack.c.b16 %v464, %v462
    %v569 = vpack.c.b16 %v465, %v463
    %v570 = vpack.c.b16 %v468, %v466
    %v571 = vpack.c.b16 %v469, %v467
    %v572 = vpack.c.b16 %v472, %v470
    %v573 = vpack.c.b16 %v473, %v471
    %v574 = vpack.c.b16 %v476, %v474
    %v575 = vpack.c.b16 %v477, %v475
    %vm674 = vcmask 130048
    %v676 = vsel %vm674, %v73, 0
    %678 = vmatprep.subr.bf16.mxu0 %v479
    %679 = vmatpush1.bf16.msra.mxu0 %v478
    %680 = vmatprep.subr.bf16.mxu0 %v481
    %681 = vmatpush1.bf16.msra.mxu0 %v480
    %682 = vmatprep.subr.bf16.mxu0 %v483
    %683 = vmatpush1.bf16.msra.mxu0 %v482
    %684 = vmatprep.subr.bf16.mxu0 %v485
    %685 = vmatpush1.bf16.msra.mxu0 %v484
    %686 = vmatprep.subr.bf16.mxu0 %v487
    %687 = vmatpush1.bf16.msra.mxu0 %v486
    %688 = vmatprep.subr.bf16.mxu0 %v489
    %689 = vmatpush1.bf16.msra.mxu0 %v488
    %690 = vmatprep.subr.bf16.mxu0 %v491
    %691 = vmatpush1.bf16.msra.mxu0 %v490
    %692 = vmatprep.subr.bf16.mxu0 %v493
    %693 = vmatpush1.bf16.msra.mxu0 %v492
    %694 = vmatprep.subr.bf16.mxu0 %v495
    %695 = vmatpush1.bf16.msra.mxu0 %v494
    %696 = vmatprep.subr.bf16.mxu0 %v497
    %697 = vmatpush1.bf16.msra.mxu0 %v496
    %698 = vmatprep.subr.bf16.mxu0 %v499
    %699 = vmatpush1.bf16.msra.mxu0 %v498
    %700 = vmatprep.subr.bf16.mxu0 %v501
    %701 = vmatpush1.bf16.msra.mxu0 %v500
    %702 = vmatprep.subr.bf16.mxu0 %v503
    %703 = vmatpush1.bf16.msra.mxu0 %v502
    %704 = vmatprep.subr.bf16.mxu0 %v505
    %705 = vmatpush1.bf16.msra.mxu0 %v504
    %706 = vmatprep.subr.bf16.mxu0 %v507
    %707 = vmatpush1.bf16.msra.mxu0 %v506
    %708 = vmatprep.subr.bf16.mxu0 %v509
    %709 = vmatpush1.bf16.msra.mxu0 %v508
    %710 = vmatprep.mubr.bf16.mxu0 %v68
    %711 = vmatmul.mubr.bf16.gmra.mrb[0].mxu0 %v67
    %v712 = vpop.f32.mrb[0].mxu0
    %v713 = vadd.f32 %v177, %v712
    %v714 = vpop.f32.mrb[0].mxu0
    %v715 = vadd.f32 %v181, %v714
    %v716 = vpop.f32.mrb[0].mxu0
    %v717 = vpop.f32.mrb[0].mxu0
    %718 = vdwg.mxu0
    %719 = vmatprep.subr.bf16.mxu0 %v511
    %720 = vmatpush1.bf16.msra.mxu0 %v510
    %721 = vmatprep.subr.bf16.mxu0 %v513
    %722 = vmatpush1.bf16.msra.mxu0 %v512
    %723 = vmatprep.subr.bf16.mxu0 %v515
    %724 = vmatpush1.bf16.msra.mxu0 %v514
    %725 = vmatprep.subr.bf16.mxu0 %v517
    %726 = vmatpush1.bf16.msra.mxu0 %v516
    %727 = vmatprep.subr.bf16.mxu0 %v519
    %728 = vmatpush1.bf16.msra.mxu0 %v518
    %729 = vmatprep.subr.bf16.mxu0 %v521
    %730 = vmatpush1.bf16.msra.mxu0 %v520
    %731 = vmatprep.subr.bf16.mxu0 %v523
    %732 = vmatpush1.bf16.msra.mxu0 %v522
    %733 = vmatprep.subr.bf16.mxu0 %v525
    %734 = vmatpush1.bf16.msra.mxu0 %v524
    %735 = vmatprep.subr.bf16.mxu0 %v527
    %736 = vmatpush1.bf16.msra.mxu0 %v526
    %737 = vmatprep.subr.bf16.mxu0 %v529
    %738 = vmatpush1.bf16.msra.mxu0 %v528
    %739 = vmatprep.subr.bf16.mxu0 %v531
    %740 = vmatpush1.bf16.msra.mxu0 %v530
    %741 = vmatprep.subr.bf16.mxu0 %v533
    %742 = vmatpush1.bf16.msra.mxu0 %v532
    %743 = vmatprep.subr.bf16.mxu0 %v535
    %744 = vmatpush1.bf16.msra.mxu0 %v534
    %745 = vmatprep.subr.bf16.mxu0 %v537
    %746 = vmatpush1.bf16.msra.mxu0 %v536
    %747 = vmatprep.subr.bf16.mxu0 %v539
    %748 = vmatpush1.bf16.msra.mxu0 %v538
    %749 = vmatprep.subr.bf16.mxu0 %v541
    %750 = vmatpush1.bf16.msra.mxu0 %v540
    %751 = vmatprep.mubr.bf16.mxu0 %v70
    %752 = vmatmul.mubr.bf16.gmra.mrb[0].mxu0 %v69
    %v753 = vpop.f32.mrb[0].mxu0
    %v754 = vadd.f32 %v713, %v753
    %v755 = vpop.f32.mrb[0].mxu0
    %v756 = vadd.f32 %v715, %v755
    %v757 = vpop.f32.mrb[0].mxu0
    %v758 = vpop.f32.mrb[0].mxu0
    %759 = vdwg.mxu0
    %760 = vmatprep.subr.bf16.mxu0 %v543
    %761 = vmatpush1.bf16.msra.mxu0 %v542
    %762 = vmatprep.subr.bf16.mxu0 %v545
    %763 = vmatpush1.bf16.msra.mxu0 %v544
    %764 = vmatprep.subr.bf16.mxu0 %v547
    %765 = vmatpush1.bf16.msra.mxu0 %v546
    %766 = vmatprep.subr.bf16.mxu0 %v549
    %767 = vmatpush1.bf16.msra.mxu0 %v548
    %768 = vmatprep.subr.bf16.mxu0 %v551
    %769 = vmatpush1.bf16.msra.mxu0 %v550
    %770 = vmatprep.subr.bf16.mxu0 %v553
    %771 = vmatpush1.bf16.msra.mxu0 %v552
    %772 = vmatprep.subr.bf16.mxu0 %v555
    %773 = vmatpush1.bf16.msra.mxu0 %v554
    %774 = vmatprep.subr.bf16.mxu0 %v557
    %775 = vmatpush1.bf16.msra.mxu0 %v556
    %776 = vmatprep.subr.bf16.mxu0 %v559
    %777 = vmatpush1.bf16.msra.mxu0 %v558
    %778 = vmatprep.subr.bf16.mxu0 %v561
    %779 = vmatpush1.bf16.msra.mxu0 %v560
    %780 = vmatprep.subr.bf16.mxu0 %v563
    %781 = vmatpush1.bf16.msra.mxu0 %v562
    %782 = vmatprep.subr.bf16.mxu0 %v565
    %783 = vmatpush1.bf16.msra.mxu0 %v564
    %784 = vmatprep.subr.bf16.mxu0 %v567
    %785 = vmatpush1.bf16.msra.mxu0 %v566
    %786 = vmatprep.subr.bf16.mxu0 %v569
    %787 = vmatpush1.bf16.msra.mxu0 %v568
    %788 = vmatprep.subr.bf16.mxu0 %v571
    %789 = vmatpush1.bf16.msra.mxu0 %v570
    %790 = vmatprep.subr.bf16.mxu0 %v573
    %791 = vmatpush1.bf16.msra.mxu0 %v572
    %792 = vmatprep.mubr.bf16.mxu0 %v72
    %793 = vmatmul.mubr.bf16.gmra.mrb[0].mxu0 %v71
    %v794 = vpop.f32.mrb[0].mxu0
    %v795 = vadd.f32 %v754, %v794
    %v796 = vpop.f32.mrb[0].mxu0
    %v797 = vadd.f32 %v756, %v796
    %v798 = vpop.f32.mrb[0].mxu0
    %v799 = vpop.f32.mrb[0].mxu0
    %800 = vdwg.mxu0
    %801 = vmatprep.subr.bf16.mxu0 %v575
    %802 = vmatpush1.bf16.msra.mxu0 %v574
    %803 = vmatprep.subr.bf16.mxu0 0
    %804 = vmatpush1.bf16.msra.mxu0 0
    %805 = vmatprep.subr.bf16.mxu0 0
    %806 = vmatpush1.bf16.msra.mxu0 0
    %807 = vmatprep.subr.bf16.mxu0 0
    %808 = vmatpush1.bf16.msra.mxu0 0
    %809 = vmatprep.subr.bf16.mxu0 0
    %810 = vmatpush1.bf16.msra.mxu0 0
    %811 = vmatprep.subr.bf16.mxu0 0
    %812 = vmatpush1.bf16.msra.mxu0 0
    %813 = vmatprep.subr.bf16.mxu0 0
    %814 = vmatpush1.bf16.msra.mxu0 0
    %815 = vmatprep.subr.bf16.mxu0 0
    %816 = vmatpush1.bf16.msra.mxu0 0
    %817 = vmatprep.subr.bf16.mxu0 0
    %818 = vmatpush1.bf16.msra.mxu0 0
    %819 = vmatprep.subr.bf16.mxu0 0
    %820 = vmatpush1.bf16.msra.mxu0 0
    %821 = vmatprep.subr.bf16.mxu0 0
    %822 = vmatpush1.bf16.msra.mxu0 0
    %823 = vmatprep.subr.bf16.mxu0 0
    %824 = vmatpush1.bf16.msra.mxu0 0
    %825 = vmatprep.subr.bf16.mxu0 0
    %826 = vmatpush1.bf16.msra.mxu0 0
    %827 = vmatprep.subr.bf16.mxu0 0
    %828 = vmatpush1.bf16.msra.mxu0 0
    %829 = vmatprep.subr.bf16.mxu0 0
    %830 = vmatpush1.bf16.msra.mxu0 0
    %831 = vmatprep.subr.bf16.mxu0 0
    %832 = vmatpush1.bf16.msra.mxu0 0
    %833 = vmatprep.mubr.bf16.mxu0 0
    %834 = vmatmul.mubr.bf16.gmra.mrb[0].mxu0 %v676
    %v835 = vpop.f32.mrb[0].mxu0
    %v836 = vadd.f32 %v795, %v835
    %v837 = vpop.f32.mrb[0].mxu0
    %v838 = vadd.f32 %v797, %v837
    %v839 = vpop.f32.mrb[0].mxu0
    %v840 = vpop.f32.mrb[0].mxu0
    %841 = vdwg.mxu0
    %v842 = vmax.f32 %v836, 0.0
    %v843 = vmax.f32 %v838, 0.0
    %v844 = vpack.c.bf16 %v842, %v842
    %v845 = vpack.c.bf16 %v843, %v843
    %v846 = vld [vmem:[%s3] sm:$0xf]
    %v847 = vld [vmem:[%s3 + $0x4] sm:$0xf]
    %v848 = vld [vmem:[%s3 + $0x8] sm:$0xf]
    %v849 = vld [vmem:[%s3 + $0xc] sm:$0xf]
    %v850 = vld [vmem:[%s3 + $0x10] sm:$0xf]
    %v851 = vld [vmem:[%s3 + $0x14] sm:$0xf]
    %v852 = vld [vmem:[%s3 + $0x18] sm:$0xf]
    %v853 = vld [vmem:[%s3 + $0x1c] sm:$0xf]
    %v854 = vld [vmem:[%s3 + $0x20] sm:$0xf]
    %v855 = vld [vmem:[%s3 + $0x24] sm:$0xf]
    %v856 = vld [vmem:[%s3 + $0x28] sm:$0xf]
    %v857 = vld [vmem:[%s3 + $0x2c] sm:$0xf]
    %v858 = vld [vmem:[%s3 + $0x30] sm:$0xf]
    %v859 = vld [vmem:[%s3 + $0x34] sm:$0xf]
    %v860 = vld [vmem:[%s3 + $0x38] sm:$0xf]
    %v861 = vld [vmem:[%s3 + $0x3c] sm:$0xf]
    %v862 = vld [vmem:[%s3 + $0x40] sm:$0xf]
    %v863 = vld [vmem:[%s3 + $0x44] sm:$0xf]
    %v864 = vld [vmem:[%s3 + $0x48] sm:$0xf]
    %v865 = vld [vmem:[%s3 + $0x4c] sm:$0xf]
    %v866 = vld [vmem:[%s3 + $0x50] sm:$0xf]
    %v867 = vld [vmem:[%s3 + $0x54] sm:$0xf]
    %v868 = vld [vmem:[%s3 + $0x58] sm:$0xf]
    %v869 = vld [vmem:[%s3 + $0x5c] sm:$0xf]
    %v870 = vld [vmem:[%s3 + $0x60] sm:$0xf]
    %v871 = vld [vmem:[%s3 + $0x64] sm:$0xf]
    %v872 = vld [vmem:[%s3 + $0x68] sm:$0xf]
    %v873 = vld [vmem:[%s3 + $0x6c] sm:$0xf]
    %v874 = vld [vmem:[%s3 + $0x70] sm:$0xf]
    %v875 = vld [vmem:[%s3 + $0x74] sm:$0xf]
    %v876 = vld [vmem:[%s3 + $0x78] sm:$0xf]
    %v877 = vld [vmem:[%s3 + $0x7c] sm:$0xf]
    %v878 = vld [vmem:[%s4] sm:$0x1]
    %v880 = vlaneseq
    %v881 = vshrl.u32 %v880, 7
    %v882 = vsub.s32 0, %v881
    %v883 = vrot.slane %v878, %v882
    %v917 = vunpack.c.l.b16 %v846
    %v918 = vunpack.c.l.b16 %v847
    %v919 = vunpack.c.l.b16 %v848
    %v920 = vunpack.c.l.b16 %v849
    %v921 = vunpack.c.l.b16 %v850
    %v922 = vunpack.c.l.b16 %v851
    %v923 = vunpack.c.l.b16 %v852
    %v924 = vunpack.c.l.b16 %v853
    %v925 = vunpack.c.l.b16 %v854
    %v926 = vunpack.c.l.b16 %v855
    %v927 = vunpack.c.l.b16 %v856
    %v928 = vunpack.c.l.b16 %v857
    %v929 = vunpack.c.l.b16 %v858
    %v930 = vunpack.c.l.b16 %v859
    %v931 = vunpack.c.l.b16 %v860
    %v932 = vunpack.c.l.b16 %v861
    %v933 = vunpack.c.l.b16 %v862
    %v934 = vunpack.c.l.b16 %v863
    %v935 = vunpack.c.l.b16 %v864
    %v936 = vunpack.c.l.b16 %v865
    %v937 = vunpack.c.l.b16 %v866
    %v938 = vunpack.c.l.b16 %v867
    %v939 = vunpack.c.l.b16 %v868
    %v940 = vunpack.c.l.b16 %v869
    %v941 = vunpack.c.l.b16 %v870
    %v942 = vunpack.c.l.b16 %v871
    %v943 = vunpack.c.l.b16 %v872
    %v944 = vunpack.c.l.b16 %v873
    %v945 = vunpack.c.l.b16 %v874
    %v946 = vunpack.c.l.b16 %v875
    %v947 = vunpack.c.l.b16 %v876
    %v948 = vunpack.c.l.b16 %v877
    %v949 = vpack.c.b16 %v918, %v917
    %v950 = vpack.c.b16 %v920, %v919
    %v951 = vpack.c.b16 %v922, %v921
    %v952 = vpack.c.b16 %v924, %v923
    %v953 = vpack.c.b16 %v926, %v925
    %v954 = vpack.c.b16 %v928, %v927
    %v955 = vpack.c.b16 %v930, %v929
    %v956 = vpack.c.b16 %v932, %v931
    %v957 = vpack.c.b16 %v934, %v933
    %v958 = vpack.c.b16 %v936, %v935
    %v959 = vpack.c.b16 %v938, %v937
    %v960 = vpack.c.b16 %v940, %v939
    %v961 = vpack.c.b16 %v942, %v941
    %v962 = vpack.c.b16 %v944, %v943
    %v963 = vpack.c.b16 %v946, %v945
    %v964 = vpack.c.b16 %v948, %v947
    %981 = vmatprep.subr.bf16.mxu0 0
    %982 = vmatpush1.bf16.msra.mxu0 %v949
    %983 = vmatprep.subr.bf16.mxu0 0
    %984 = vmatpush1.bf16.msra.mxu0 %v950
    %985 = vmatprep.subr.bf16.mxu0 0
    %986 = vmatpush1.bf16.msra.mxu0 %v951
    %987 = vmatprep.subr.bf16.mxu0 0
    %988 = vmatpush1.bf16.msra.mxu0 %v952
    %989 = vmatprep.subr.bf16.mxu0 0
    %990 = vmatpush1.bf16.msra.mxu0 %v953
    %991 = vmatprep.subr.bf16.mxu0 0
    %992 = vmatpush1.bf16.msra.mxu0 %v954
    %993 = vmatprep.subr.bf16.mxu0 0
    %994 = vmatpush1.bf16.msra.mxu0 %v955
    %995 = vmatprep.subr.bf16.mxu0 0
    %996 = vmatpush1.bf16.msra.mxu0 %v956
    %997 = vmatprep.subr.bf16.mxu0 0
    %998 = vmatpush1.bf16.msra.mxu0 %v957
    %999 = vmatprep.subr.bf16.mxu0 0
    %1000 = vmatpush1.bf16.msra.mxu0 %v958
    %1001 = vmatprep.subr.bf16.mxu0 0
    %1002 = vmatpush1.bf16.msra.mxu0 %v959
    %1003 = vmatprep.subr.bf16.mxu0 0
    %1004 = vmatpush1.bf16.msra.mxu0 %v960
    %1005 = vmatprep.subr.bf16.mxu0 0
    %1006 = vmatpush1.bf16.msra.mxu0 %v961
    %1007 = vmatprep.subr.bf16.mxu0 0
    %1008 = vmatpush1.bf16.msra.mxu0 %v962
    %1009 = vmatprep.subr.bf16.mxu0 0
    %1010 = vmatpush1.bf16.msra.mxu0 %v963
    %1011 = vmatprep.subr.bf16.mxu0 0
    %1012 = vmatpush1.bf16.msra.mxu0 %v964
    %1013 = vmatprep.mubr.bf16.mxu0 %v845
    %1014 = vmatmul.mubr.bf16.gmra.mrb[0].mxu0 %v844
    %v1015 = vpop.f32.mrb[0].mxu0
    %v1016 = vadd.f32 %v883, %v1015
    %v1017 = vpop.f32.mrb[0].mxu0
    %v1018 = vpop.f32.mrb[0].mxu0
    %v1019 = vpop.f32.mrb[0].mxu0
    %1020 = vdwg.mxu0
    %v1021 = vmax.f32 %v1016, 0.0
    %v1022 = vpack.c.bf16 %v1021, %v1021
    %v1023 = vld [vmem:[%s5] sm:$0xf]
    %v1024 = vld [vmem:[%s5 + $0x4] sm:$0xf]
    %v1025 = vld [vmem:[%s5 + $0x8] sm:$0xf]
    %v1026 = vld [vmem:[%s5 + $0xc] sm:$0xf]
    %v1027 = vld [vmem:[%s5 + $0x10] sm:$0xf]
    %v1028 = vld [vmem:[%s5 + $0x14] sm:$0xf]
    %v1029 = vld [vmem:[%s5 + $0x18] sm:$0xf]
    %v1030 = vld [vmem:[%s5 + $0x1c] sm:$0xf]
    %v1031 = vld [vmem:[%s5 + $0x20] sm:$0xf]
    %v1032 = vld [vmem:[%s5 + $0x24] sm:$0xf]
    %v1033 = vld [vmem:[%s5 + $0x28] sm:$0xf]
    %v1034 = vld [vmem:[%s5 + $0x2c] sm:$0xf]
    %v1035 = vld [vmem:[%s5 + $0x30] sm:$0xf]
    %v1036 = vld [vmem:[%s5 + $0x34] sm:$0xf]
    %v1037 = vld [vmem:[%s5 + $0x38] sm:$0xf]
    %v1038 = vld [vmem:[%s5 + $0x3c] sm:$0xf]
    %v1039 = vld [vmem:[%s6] sm:$0x1]
    %v1041 = vlaneseq
    %v1042 = vshrl.u32 %v1041, 7
    %v1043 = vsub.s32 0, %v1042
    %v1044 = vrot.slane %v1039, %v1043
    %v1062 = vunpack.c.l.b16 %v1023
    %v1063 = vunpack.c.l.b16 %v1024
    %v1064 = vunpack.c.l.b16 %v1025
    %v1065 = vunpack.c.l.b16 %v1026
    %v1066 = vunpack.c.l.b16 %v1027
    %v1067 = vunpack.c.l.b16 %v1028
    %v1068 = vunpack.c.l.b16 %v1029
    %v1069 = vunpack.c.l.b16 %v1030
    %v1070 = vunpack.c.l.b16 %v1031
    %v1071 = vunpack.c.l.b16 %v1032
    %v1072 = vunpack.c.l.b16 %v1033
    %v1073 = vunpack.c.l.b16 %v1034
    %v1074 = vunpack.c.l.b16 %v1035
    %v1075 = vunpack.c.l.b16 %v1036
    %v1076 = vunpack.c.l.b16 %v1037
    %v1077 = vunpack.c.l.b16 %v1038
    %v1078 = vpack.c.b16 %v1063, %v1062
    %v1079 = vpack.c.b16 %v1065, %v1064
    %v1080 = vpack.c.b16 %v1067, %v1066
    %v1081 = vpack.c.b16 %v1069, %v1068
    %v1082 = vpack.c.b16 %v1071, %v1070
    %v1083 = vpack.c.b16 %v1073, %v1072
    %v1084 = vpack.c.b16 %v1075, %v1074
    %v1085 = vpack.c.b16 %v1077, %v1076
    %1094 = vmatprep.subr.bf16.mxu0 0
    %1095 = vmatpush1.bf16.msra.mxu0 %v1078
    %1096 = vmatprep.subr.bf16.mxu0 0
    %1097 = vmatpush1.bf16.msra.mxu0 %v1079
    %1098 = vmatprep.subr.bf16.mxu0 0
    %1099 = vmatpush1.bf16.msra.mxu0 %v1080
    %1100 = vmatprep.subr.bf16.mxu0 0
    %1101 = vmatpush1.bf16.msra.mxu0 %v1081
    %1102 = vmatprep.subr.bf16.mxu0 0
    %1103 = vmatpush1.bf16.msra.mxu0 %v1082
    %1104 = vmatprep.subr.bf16.mxu0 0
    %1105 = vmatpush1.bf16.msra.mxu0 %v1083
    %1106 = vmatprep.subr.bf16.mxu0 0
    %1107 = vmatpush1.bf16.msra.mxu0 %v1084
    %1108 = vmatprep.subr.bf16.mxu0 0
    %1109 = vmatpush1.bf16.msra.mxu0 %v1085
    %1110 = vmatprep.subr.bf16.mxu0 0
    %1111 = vmatpush1.bf16.msra.mxu0 0
    %1112 = vmatprep.subr.bf16.mxu0 0
    %1113 = vmatpush1.bf16.msra.mxu0 0
    %1114 = vmatprep.subr.bf16.mxu0 0
    %1115 = vmatpush1.bf16.msra.mxu0 0
    %1116 = vmatprep.subr.bf16.mxu0 0
    %1117 = vmatpush1.bf16.msra.mxu0 0
    %1118 = vmatprep.subr.bf16.mxu0 0
    %1119 = vmatpush1.bf16.msra.mxu0 0
    %1120 = vmatprep.subr.bf16.mxu0 0
    %1121 = vmatpush1.bf16.msra.mxu0 0
    %1122 = vmatprep.subr.bf16.mxu0 0
    %1123 = vmatpush1.bf16.msra.mxu0 0
    %1124 = vmatprep.subr.bf16.mxu0 0
    %1125 = vmatpush1.bf16.msra.mxu0 0
    %1126 = vmatprep.mubr.bf16.mxu0 0
    %1127 = vmatmul.mubr.bf16.gmra.mrb[0].mxu0 %v1022
    %v1128 = vpop.f32.mrb[0].mxu0
    %v1129 = vadd.f32 %v1044, %v1128
    %v1130 = vpop.f32.mrb[0].mxu0
    %v1131 = vpop.f32.mrb[0].mxu0
    %v1132 = vpop.f32.mrb[0].mxu0
    %1133 = vdwg.mxu0
    %v1134 = vmax.f32 %v1129, 0.0
    %v1135 = vpack.c.bf16 %v1134, %v1134
    %v1136 = vld [vmem:[%s7] sm:$0xf]
    %v1137 = vld [vmem:[%s7 + $0x4] sm:$0xf]
    %v1138 = vld [vmem:[%s7 + $0x8] sm:$0xf]
    %v1139 = vld [vmem:[%s7 + $0xc] sm:$0xf]
    %v1140 = vld [vmem:[%s7 + $0x10] sm:$0xf]
    %v1141 = vld [vmem:[%s7 + $0x14] sm:$0xf]
    %v1142 = vld [vmem:[%s7 + $0x18] sm:$0xf]
    %v1143 = vld [vmem:[%s7 + $0x1c] sm:$0xf]
    %v1144 = vld [vmem:[%s8] sm:$0x1]
    %v1146 = vlaneseq
    %v1147 = vshrl.u32 %v1146, 7
    %v1148 = vsub.s32 0, %v1147
    %v1149 = vrot.slane %v1144, %v1148
    %v1159 = vunpack.c.l.b16 %v1136
    %v1160 = vunpack.c.l.b16 %v1137
    %v1161 = vunpack.c.l.b16 %v1138
    %v1162 = vunpack.c.l.b16 %v1139
    %v1163 = vunpack.c.l.b16 %v1140
    %v1164 = vunpack.c.l.b16 %v1141
    %v1165 = vunpack.c.l.b16 %v1142
    %v1166 = vunpack.c.l.b16 %v1143
    %v1167 = vpack.c.b16 %v1160, %v1159
    %v1168 = vpack.c.b16 %v1162, %v1161
    %v1169 = vpack.c.b16 %v1164, %v1163
    %v1170 = vpack.c.b16 %v1166, %v1165
    %vm1175 = vcmask 523264
    %v1177 = vsel %vm1175, %v1135, 0
    %1179 = vmatprep.subr.bf16.mxu0 0
    %1180 = vmatpush1.bf16.msra.mxu0 %v1167
    %1181 = vmatprep.subr.bf16.mxu0 0
    %1182 = vmatpush1.bf16.msra.mxu0 %v1168
    %1183 = vmatprep.subr.bf16.mxu0 0
    %1184 = vmatpush1.bf16.msra.mxu0 %v1169
    %1185 = vmatprep.subr.bf16.mxu0 0
    %1186 = vmatpush1.bf16.msra.mxu0 %v1170
    %1187 = vmatprep.subr.bf16.mxu0 0
    %1188 = vmatpush1.bf16.msra.mxu0 0
    %1189 = vmatprep.subr.bf16.mxu0 0
    %1190 = vmatpush1.bf16.msra.mxu0 0
    %1191 = vmatprep.subr.bf16.mxu0 0
    %1192 = vmatpush1.bf16.msra.mxu0 0
    %1193 = vmatprep.subr.bf16.mxu0 0
    %1194 = vmatpush1.bf16.msra.mxu0 0
    %1195 = vmatprep.subr.bf16.mxu0 0
    %1196 = vmatpush1.bf16.msra.mxu0 0
    %1197 = vmatprep.subr.bf16.mxu0 0
    %1198 = vmatpush1.bf16.msra.mxu0 0
    %1199 = vmatprep.subr.bf16.mxu0 0
    %1200 = vmatpush1.bf16.msra.mxu0 0
    %1201 = vmatprep.subr.bf16.mxu0 0
    %1202 = vmatpush1.bf16.msra.mxu0 0
    %1203 = vmatprep.subr.bf16.mxu0 0
    %1204 = vmatpush1.bf16.msra.mxu0 0
    %1205 = vmatprep.subr.bf16.mxu0 0
    %1206 = vmatpush1.bf16.msra.mxu0 0
    %1207 = vmatprep.subr.bf16.mxu0 0
    %1208 = vmatpush1.bf16.msra.mxu0 0
    %1209 = vmatprep.subr.bf16.mxu0 0
    %1210 = vmatpush1.bf16.msra.mxu0 0
    %1211 = vmatprep.mubr.bf16.mxu0 0
    %1212 = vmatmul.mubr.bf16.gmra.mrb[0].mxu0 %v1177
    %v1213 = vpop.f32.mrb[0].mxu0
    %v1214 = vadd.f32 %v1149, %v1213
    %v1215 = vpop.f32.mrb[0].mxu0
    %v1216 = vpop.f32.mrb[0].mxu0
    %v1217 = vpop.f32.mrb[0].mxu0
    %1218 = vdwg.mxu0
    %vm1219 = vcmask 80896
    %v1220 = vsel %vm1219, %v1214, -inf
    %1221 = vmax.xlane.f32.xlu0 %v1220
    %v1222 = vpop.xlane.xlu0 %1221
    %v1223 = vsub.f32 %v1214, %v1222
    %v1224 = vmul.f32 %v1223, 1.442695
    %v1225 = vpow.pop %v1224
    %v1226 = vsel %vm1219, %v1225, 0.0
    %1227 = vadd.xlane.f32.xlu0 %v1226
    %v1228 = vpop.xlane.xlu0 %1227
    %v1229 = vlog2.pop %v1228
    %v1230 = vmul.f32 %v1229, 0.6931472
    %v1231 = vsub.f32 %v1223, %v1230
    %1232 = vst.msk [vmem:[#allocation7] sm:$0xff] %vm1219, %v1231
    // Predicated region
    $region46: #{tpu_custom_call.1} parent=1 // pred_check
      _
    $region47: #{tpu_custom_call.1} parent=1 // pred_check_branch
      %1234 = sbr.rel (0) target = $region49
    $region48: #{tpu_custom_call.1} parent=1 // pred_region
      %s1236 = ssub.s32 128, 128
      %1237 = vsyncadd [#allocation4], %s1236
      %s1239 = sshll.u32 [#allocation7], 4
      %s1240 = int_to_ptr.vmem [resolvable:$true] %s1239
      %1242 = dma.vmem_to_hbm [thread:$0]  %s1240, 128, %s9, [#allocation4]
    $region49: #{tpu_custom_call.1} parent=1 // pred_fallthru
      _
    // Predicated region
    $region50: #{tpu_custom_call.1} parent=1 // pred_check
      _
    $region51: #{tpu_custom_call.1} parent=1 // pred_check_branch
      %1244 = sbr.rel (0) target = $region53
    $region52: #{tpu_custom_call.1} parent=1 // pred_region
      %1245 = dma.done [#allocation4], 128
    $region53: #{tpu_custom_call.1} parent=1 // pred_fallthru
      _
    %1246 = vsyncpa [#allocation3], 1
    %1247 = vsyncpa [#allocation6], 1
    %1248 = vsyncpa [#allocation4], 1

</llo_original>
